<compile_context>
chip_gen: v6e
topology: v6e:2x2x1
jax: 0.10.0
libtpu: 0.0.40
codegen_flags: <defaults>
</compile_context>

<pallas_src>
import functools
import math

import jax
import jax.numpy as jnp
from jax.experimental import pallas as pl
from jax.experimental.pallas import tpu as pltpu

_SQRT_2_INV = 1.0 / math.sqrt(2.0)


def _erf(x):
    # Abramowitz & Stegun 7.1.26 rational approximation (max abs err ~1.5e-7,
    # i.e. float32 eps) -- matches torch's exact-erf GELU without relying on a
    # lax.erf Mosaic lowering.
    p = 0.3275911
    a1, a2, a3, a4, a5 = (0.254829592, -0.284496736, 1.421413741,
                          -1.453152027, 1.061405429)
    s = jnp.where(x >= 0.0, 1.0, -1.0)
    ax = jnp.abs(x)
    t = 1.0 / (1.0 + p * ax)
    poly = ((((a5 * t + a4) * t + a3) * t + a2) * t + a1) * t
    return s * (1.0 - poly * jnp.exp(-ax * ax))


def _gelu_exact(x):
    return 0.5 * x * (1.0 + _erf(x * _SQRT_2_INV))


# ----------------------------- Pallas kernel -------------------------------- #

def _fused_vitup2_kernel(x_ref, w1_ref, b1_ref, g_ref, beta_ref, gmat_ref,
                         w2_ref, b2_ref, o_ref, *, inv_c):
    # x_ref:    (TM, C)          input pixels, channels-last
    # w1_ref:   (C, 4C)          stage-1 deconv, 4 taps fused on lanes
    # b1/g/beta:(1, 4C)          bias / LN gamma / LN beta, tiled per tap
    # gmat_ref: (4C, 4C)         block-diag ones (group-sum/broadcast matrix)
    # w2_ref:   (4C, 16C)        stage-2 deconv, block-diag over stage-1 taps
    # b2_ref:   (1, 16C)
    # o_ref:    (TM, 16C)        lane layout (ki, kj, mi, mj, c)

    # Stage 1: all 4 deconv taps in one lane-dense matmul.
    y = jnp.dot(x_ref[...], w1_ref[...], preferred_element_type=jnp.float32)
    y = y + b1_ref[...]

    # Group LayerNorm (eps=1e-6) at full 128-lane width: per-group mean and
    # variance are computed + broadcast with one MXU matmul each.
    gmat = gmat_ref[...]
    mu = jnp.dot(y, gmat, preferred_element_type=jnp.float32) * inv_c
    d = y - mu
    var = jnp.dot(d * d, gmat, preferred_element_type=jnp.float32) * inv_c
    yn = d * jax.lax.rsqrt(var + 1e-6)
    yn = yn * g_ref[...] + beta_ref[...]

    # Exact-erf GELU.
    yg = _gelu_exact(yn)

    # Stage 2: block-diagonal fused deconv taps -> (TM, 16C) lane-dense output.
    z = jnp.dot(yg, w2_ref[...], preferred_element_type=jnp.float32)
    o_ref[...] = (z + b2_ref[...]).astype(o_ref.dtype)


# ------------------------------ wrapper glue -------------------------------- #

def _round_up(n, m):
    return (n + m - 1) // m * m


def vitup2_forward(x_nchw, params):
    """Equivalent of VITUp_2.forward applied to x[0] (NCHW in, NCHW out)."""
    B, C, H, W = x_nchw.shape
    N = B * H * W
    x = jnp.transpose(x_nchw, (0, 2, 3, 1)).reshape(N, C)

    # --- parameter packing (taps fused along the lane axis) ---
    # torch ConvTranspose2d weight layout: (Cin, Cout, kH, kW); tap kp = ki*2+kj.
    w1 = jnp.transpose(params["w1"], (0, 2, 3, 1)).reshape(C, 4 * C)
    b1 = jnp.tile(params["b1"], 4)[None, :]
    gamma = jnp.tile(params["gamma"], 4)[None, :]
    beta = jnp.tile(params["beta"], 4)[None, :]

    w2f = jnp.transpose(params["w2"], (0, 2, 3, 1)).reshape(C, 4 * C)
    # Block-diagonal: apply w2f independently to each of the 4 stage-1 tap
    # groups (fine at small C; at large C you'd slice per group instead).
    w2_big = jnp.einsum("ab,ij->aibj", jnp.eye(4, dtype=w2f.dtype),
                        w2f).reshape(4 * C, 16 * C)
    b2 = jnp.tile(params["b2"], 16)[None, :]

    # Group-sum / broadcast matrix for lane-dense group LayerNorm.
    gid = jnp.arange(4 * C) // C
    gmat = (gid[:, None] == gid[None, :]).astype(jnp.float32)  # (4C, 4C)

    # --- tiling: large lane-dense row tiles, N padded to a tile multiple ---
    TM = min(256, _round_up(N, 8))
    N_pad = _round_up(N, TM)
    if N_pad != N:
        x = jnp.pad(x, ((0, N_pad - N), (0, 0)))

    const = lambda i: (0, 0)  # grid-invariant operands stay VMEM-resident
    out_flat = pl.pallas_call(
        functools.partial(_fused_vitup2_kernel, inv_c=1.0 / C),
        out_shape=jax.ShapeDtypeStruct((N_pad, 16 * C), jnp.float32),
        grid_spec=pltpu.PrefetchScalarGridSpec(
            num_scalar_prefetch=0,
            grid=(N_pad // TM,),
            in_specs=[
                pl.BlockSpec((TM, C), lambda i: (i, 0)),        # x tile
                pl.BlockSpec((C, 4 * C), const),                # w1 fused
                pl.BlockSpec((1, 4 * C), const),                # b1
                pl.BlockSpec((1, 4 * C), const),                # gamma
                pl.BlockSpec((1, 4 * C), const),                # beta
                pl.BlockSpec((4 * C, 4 * C), const),            # group matrix
                pl.BlockSpec((4 * C, 16 * C), const),           # w2 block-diag
                pl.BlockSpec((1, 16 * C), const),               # b2
            ],
            out_specs=pl.BlockSpec((TM, 16 * C), lambda i: (i, 0)),
        ),
        compiler_params=pltpu.CompilerParams(
            dimension_semantics=("parallel",)),
    )(x, w1, b1, gamma, beta, gmat, w2_big, b2)

    out_flat = out_flat[:N]
    # Lane layout per pixel is (ki, kj, mi, mj, c); output pixel is
    # (4i + 2ki + mi, 4j + 2kj + mj).  Fold the spatial interleave into the
    # single (required) transpose to NCHW.
    out = out_flat.reshape(B, H, W, 2, 2, 2, 2, C)
    out = jnp.transpose(out, (0, 7, 1, 3, 5, 2, 4, 6))
    return out.reshape(B, C, 4 * H, 4 * W)


# --------------------------- pure-JAX reference ----------------------------- #

def _ref_forward(x_nchw, params):
    x = jnp.transpose(x_nchw, (0, 2, 3, 1))

    def deconv(x, w, b):
        B, H, W, _ = x.shape
        y = jnp.einsum("bhwi,iokl->bhkwlo", x, w)
        return y.reshape(B, 2 * H, 2 * W, -1) + b

    y = deconv(x, params["w1"], params["b1"])
    mu = jnp.mean(y, axis=-1, keepdims=True)
    var = jnp.mean((y - mu) ** 2, axis=-1, keepdims=True)
    y = (y - mu) / jnp.sqrt(var + 1e-6)
    y = y * params["gamma"] + params["beta"]
    y = 0.5 * y * (1.0 + jax.scipy.special.erf(y * _SQRT_2_INV))
    y = deconv(y, params["w2"], params["b2"])
    return jnp.transpose(y, (0, 3, 1, 2))


# ----------------------------------- main ----------------------------------- #

if __name__ == "__main__":
    B, C, H, W = 2, 32, 8, 8  # embed_dim = 32
    key = jax.random.PRNGKey(0)
    kx, k1, k2, k3, k4, k5, k6 = jax.random.split(key, 7)
    scale = 1.0 / math.sqrt(C * 4)
    params = {
        "w1": jax.random.normal(k1, (C, C, 2, 2), jnp.float32) * scale,
        "b1": jax.random.normal(k2, (C,), jnp.float32) * 0.02,
        "gamma": 1.0 + 0.1 * jax.random.normal(k3, (C,), jnp.float32),
        "beta": 0.1 * jax.random.normal(k4, (C,), jnp.float32),
        "w2": jax.random.normal(k5, (C, C, 2, 2), jnp.float32) * scale,
        "b2": jax.random.normal(k6, (C,), jnp.float32) * 0.02,
    }
    x0 = jax.random.normal(kx, (B, C, H, W), jnp.float32)
    x = [x0]  # VITUp_2.forward takes a list/tuple and uses x[0]

    out = jax.jit(vitup2_forward)(x[0], params)
    out = jax.block_until_ready(out)
    assert out.shape == (B, C, 4 * H, 4 * W), out.shape

    ref = _ref_forward(x[0], params)
    max_err = float(jnp.max(jnp.abs(out - ref)))
    assert jnp.allclose(out, ref, atol=1e-3, rtol=1e-3), max_err

    print("KERNEL_OK")
</pallas_src>

<mosaic_0001>
module attributes {stable_mosaic.version = 11 : i64} {
  func.func @_fused_vitup2_kernel(%arg0: i32, %arg1: memref<128x32xf32, #tpu.memory_space<vmem>>, %arg2: memref<32x128xf32, #tpu.memory_space<vmem>>, %arg3: memref<1x128xf32, #tpu.memory_space<vmem>>, %arg4: memref<1x128xf32, #tpu.memory_space<vmem>>, %arg5: memref<1x128xf32, #tpu.memory_space<vmem>>, %arg6: memref<128x128xf32, #tpu.memory_space<vmem>>, %arg7: memref<128x512xf32, #tpu.memory_space<vmem>>, %arg8: memref<1x512xf32, #tpu.memory_space<vmem>>, %arg9: memref<128x512xf32, #tpu.memory_space<vmem>>) attributes {dimension_semantics = [#tpu.dimension_semantics<parallel>], iteration_bounds = array<i64: 1>, scalar_prefetch = 0 : i64, scratch_operands = 0 : i64, tpu.core_type = #tpu.core_type<tc>, window_params = [{transform_indices = @transform_0, window_bounds = array<i64: 128, 32>}, {pipeline_mode = #tpu.pipeline_mode<synchronous>, transform_indices = @transform_1, window_bounds = array<i64: 32, 128>}, {pipeline_mode = #tpu.pipeline_mode<synchronous>, transform_indices = @transform_2, window_bounds = array<i64: 1, 128>}, {pipeline_mode = #tpu.pipeline_mode<synchronous>, transform_indices = @transform_3, window_bounds = array<i64: 1, 128>}, {pipeline_mode = #tpu.pipeline_mode<synchronous>, transform_indices = @transform_4, window_bounds = array<i64: 1, 128>}, {pipeline_mode = #tpu.pipeline_mode<synchronous>, transform_indices = @transform_5, window_bounds = array<i64: 128, 128>}, {pipeline_mode = #tpu.pipeline_mode<synchronous>, transform_indices = @transform_6, window_bounds = array<i64: 128, 512>}, {pipeline_mode = #tpu.pipeline_mode<synchronous>, transform_indices = @transform_7, window_bounds = array<i64: 1, 512>}, {transform_indices = @transform_8, window_bounds = array<i64: 128, 512>}]} {
    %c0 = arith.constant 0 : index
    %c0_0 = arith.constant 0 : index
    %0 = vector.load %arg1[%c0, %c0_0] : memref<128x32xf32, #tpu.memory_space<vmem>>, vector<128x32xf32>
    %c0_1 = arith.constant 0 : index
    %c0_2 = arith.constant 0 : index
    %1 = vector.load %arg2[%c0_1, %c0_2] : memref<32x128xf32, #tpu.memory_space<vmem>>, vector<32x128xf32>
    %cst = arith.constant dense<0.000000e+00> : vector<128x128xf32>
    %2 = tpu.matmul %0, %1, %cst {dimension_numbers = #tpu.dot_dimension_numbers<[1], [0], [0], [1], [0, 0, 1, 1], [], []>} : vector<128x32xf32>, vector<32x128xf32>, vector<128x128xf32> -> vector<128x128xf32>
    %c0_3 = arith.constant 0 : index
    %c0_4 = arith.constant 0 : index
    %3 = vector.load %arg3[%c0_3, %c0_4] : memref<1x128xf32, #tpu.memory_space<vmem>>, vector<1x128xf32>
    %4 = vector.broadcast %3 : vector<1x128xf32> to vector<128x128xf32>
    %5 = arith.addf %2, %4 : vector<128x128xf32>
    %c0_5 = arith.constant 0 : index
    %c0_6 = arith.constant 0 : index
    %6 = vector.load %arg6[%c0_5, %c0_6] : memref<128x128xf32, #tpu.memory_space<vmem>>, vector<128x128xf32>
    %cst_7 = arith.constant dense<0.000000e+00> : vector<128x128xf32>
    %7 = tpu.matmul %5, %6, %cst_7 {dimension_numbers = #tpu.dot_dimension_numbers<[1], [0], [0], [1], [0, 0, 1, 1], [], []>} : vector<128x128xf32>, vector<128x128xf32>, vector<128x128xf32> -> vector<128x128xf32>
    %cst_8 = arith.constant 3.125000e-02 : f32
    %8 = vector.broadcast %cst_8 : f32 to vector<128x128xf32>
    %9 = arith.mulf %7, %8 : vector<128x128xf32>
    %10 = arith.subf %5, %9 : vector<128x128xf32>
    %11 = arith.mulf %10, %10 : vector<128x128xf32>
    %cst_9 = arith.constant dense<0.000000e+00> : vector<128x128xf32>
    %12 = tpu.matmul %11, %6, %cst_9 {dimension_numbers = #tpu.dot_dimension_numbers<[1], [0], [0], [1], [0, 0, 1, 1], [], []>} : vector<128x128xf32>, vector<128x128xf32>, vector<128x128xf32> -> vector<128x128xf32>
    %cst_10 = arith.constant 3.125000e-02 : f32
    %13 = vector.broadcast %cst_10 : f32 to vector<128x128xf32>
    %14 = arith.mulf %12, %13 : vector<128x128xf32>
    %cst_11 = arith.constant 9.99999997E-7 : f32
    %15 = vector.broadcast %cst_11 : f32 to vector<128x128xf32>
    %16 = arith.addf %14, %15 : vector<128x128xf32>
    %17 = math.rsqrt %16 : vector<128x128xf32>
    %18 = arith.mulf %10, %17 : vector<128x128xf32>
    %c0_12 = arith.constant 0 : index
    %c0_13 = arith.constant 0 : index
    %19 = vector.load %arg4[%c0_12, %c0_13] : memref<1x128xf32, #tpu.memory_space<vmem>>, vector<1x128xf32>
    %20 = vector.broadcast %19 : vector<1x128xf32> to vector<128x128xf32>
    %21 = arith.mulf %18, %20 : vector<128x128xf32>
    %c0_14 = arith.constant 0 : index
    %c0_15 = arith.constant 0 : index
    %22 = vector.load %arg5[%c0_14, %c0_15] : memref<1x128xf32, #tpu.memory_space<vmem>>, vector<1x128xf32>
    %23 = vector.broadcast %22 : vector<1x128xf32> to vector<128x128xf32>
    %24 = arith.addf %21, %23 : vector<128x128xf32>
    %cst_16 = arith.constant 5.000000e-01 : f32
    %25 = vector.broadcast %cst_16 : f32 to vector<128x128xf32>
    %26 = arith.mulf %25, %24 : vector<128x128xf32>
    %cst_17 = arith.constant 0.707106769 : f32
    %27 = vector.broadcast %cst_17 : f32 to vector<128x128xf32>
    %28 = arith.mulf %24, %27 : vector<128x128xf32>
    %cst_18 = arith.constant 0.000000e+00 : f32
    %29 = vector.broadcast %cst_18 : f32 to vector<128x128xf32>
    %30 = arith.cmpf oge, %28, %29 : vector<128x128xf32>
    %cst_19 = arith.constant 1.000000e+00 : f32
    %cst_20 = arith.constant -1.000000e+00 : f32
    %31 = vector.broadcast %cst_19 : f32 to vector<128x128xf32>
    %32 = vector.broadcast %cst_20 : f32 to vector<128x128xf32>
    %33 = arith.select %30, %31, %32 : vector<128x128xi1>, vector<128x128xf32>
    %34 = math.absf %28 : vector<128x128xf32>
    %cst_21 = arith.constant 0.327591091 : f32
    %35 = vector.broadcast %cst_21 : f32 to vector<128x128xf32>
    %36 = arith.mulf %35, %34 : vector<128x128xf32>
    %cst_22 = arith.constant 1.000000e+00 : f32
    %37 = vector.broadcast %cst_22 : f32 to vector<128x128xf32>
    %38 = arith.addf %37, %36 : vector<128x128xf32>
    %cst_23 = arith.constant 1.000000e+00 : f32
    %39 = vector.broadcast %cst_23 : f32 to vector<128x128xf32>
    %40 = arith.divf %39, %38 : vector<128x128xf32>
    %cst_24 = arith.constant 1.06140542 : f32
    %41 = vector.broadcast %cst_24 : f32 to vector<128x128xf32>
    %42 = arith.mulf %41, %40 : vector<128x128xf32>
    %cst_25 = arith.constant -1.45315206 : f32
    %43 = vector.broadcast %cst_25 : f32 to vector<128x128xf32>
    %44 = arith.addf %42, %43 : vector<128x128xf32>
    %45 = arith.mulf %44, %40 : vector<128x128xf32>
    %cst_26 = arith.constant 1.42141378 : f32
    %46 = vector.broadcast %cst_26 : f32 to vector<128x128xf32>
    %47 = arith.addf %45, %46 : vector<128x128xf32>
    %48 = arith.mulf %47, %40 : vector<128x128xf32>
    %cst_27 = arith.constant -0.284496725 : f32
    %49 = vector.broadcast %cst_27 : f32 to vector<128x128xf32>
    %50 = arith.addf %48, %49 : vector<128x128xf32>
    %51 = arith.mulf %50, %40 : vector<128x128xf32>
    %cst_28 = arith.constant 0.254829586 : f32
    %52 = vector.broadcast %cst_28 : f32 to vector<128x128xf32>
    %53 = arith.addf %51, %52 : vector<128x128xf32>
    %54 = arith.mulf %53, %40 : vector<128x128xf32>
    %cst_29 = arith.constant 0.000000e+00 : f32
    %55 = vector.broadcast %cst_29 : f32 to vector<128x128xf32>
    %56 = arith.subf %55, %34 : vector<128x128xf32>
    %57 = arith.mulf %56, %34 : vector<128x128xf32>
    %58 = math.exp %57 : vector<128x128xf32>
    %59 = arith.mulf %54, %58 : vector<128x128xf32>
    %cst_30 = arith.constant 1.000000e+00 : f32
    %60 = vector.broadcast %cst_30 : f32 to vector<128x128xf32>
    %61 = arith.subf %60, %59 : vector<128x128xf32>
    %62 = arith.mulf %33, %61 : vector<128x128xf32>
    %cst_31 = arith.constant 1.000000e+00 : f32
    %63 = vector.broadcast %cst_31 : f32 to vector<128x128xf32>
    %64 = arith.addf %63, %62 : vector<128x128xf32>
    %65 = arith.mulf %26, %64 : vector<128x128xf32>
    %c0_32 = arith.constant 0 : index
    %c0_33 = arith.constant 0 : index
    %66 = vector.load %arg7[%c0_32, %c0_33] : memref<128x512xf32, #tpu.memory_space<vmem>>, vector<128x512xf32>
    %cst_34 = arith.constant dense<0.000000e+00> : vector<128x512xf32>
    %67 = tpu.matmul %65, %66, %cst_34 {dimension_numbers = #tpu.dot_dimension_numbers<[1], [0], [0], [1], [0, 0, 1, 1], [], []>} : vector<128x128xf32>, vector<128x512xf32>, vector<128x512xf32> -> vector<128x512xf32>
    %c0_35 = arith.constant 0 : index
    %c0_36 = arith.constant 0 : index
    %68 = vector.load %arg8[%c0_35, %c0_36] : memref<1x512xf32, #tpu.memory_space<vmem>>, vector<1x512xf32>
    %69 = vector.broadcast %68 : vector<1x512xf32> to vector<128x512xf32>
    %70 = arith.addf %67, %69 : vector<128x512xf32>
    %c0_37 = arith.constant 0 : index
    %c0_38 = arith.constant 0 : index
    %71 = vector.load %arg9[%c0_37, %c0_38] : memref<128x512xf32, #tpu.memory_space<vmem>>, vector<128x512xf32>
    tpu.vector_store %arg9[%c0_37, %c0_38], %70 {strides = array<i32>} : memref<128x512xf32, #tpu.memory_space<vmem>>, vector<128x512xf32>,
    return
  }
  func.func @transform_0(%arg0: i32) -> (i32, i32) {
    %c0_i32 = arith.constant 0 : i32
    %c0_i32_0 = arith.constant 0 : i32
    return %arg0, %c0_i32 : i32, i32
  }
  func.func @transform_1(%arg0: i32) -> (i32, i32) {
    %c0_i32 = arith.constant 0 : i32
    %c0_i32_0 = arith.constant 0 : i32
    %c0_i32_1 = arith.constant 0 : i32
    return %c0_i32, %c0_i32_0 : i32, i32
  }
  func.func @transform_2(%arg0: i32) -> (i32, i32) {
    %c0_i32 = arith.constant 0 : i32
    %c0_i32_0 = arith.constant 0 : i32
    %c0_i32_1 = arith.constant 0 : i32
    return %c0_i32, %c0_i32_0 : i32, i32
  }
  func.func @transform_3(%arg0: i32) -> (i32, i32) {
    %c0_i32 = arith.constant 0 : i32
    %c0_i32_0 = arith.constant 0 : i32
    %c0_i32_1 = arith.constant 0 : i32
    return %c0_i32, %c0_i32_0 : i32, i32
  }
  func.func @transform_4(%arg0: i32) -> (i32, i32) {
    %c0_i32 = arith.constant 0 : i32
    %c0_i32_0 = arith.constant 0 : i32
    %c0_i32_1 = arith.constant 0 : i32
    return %c0_i32, %c0_i32_0 : i32, i32
  }
  func.func @transform_5(%arg0: i32) -> (i32, i32) {
    %c0_i32 = arith.constant 0 : i32
    %c0_i32_0 = arith.constant 0 : i32
    %c0_i32_1 = arith.constant 0 : i32
    return %c0_i32, %c0_i32_0 : i32, i32
  }
  func.func @transform_6(%arg0: i32) -> (i32, i32) {
    %c0_i32 = arith.constant 0 : i32
    %c0_i32_0 = arith.constant 0 : i32
    %c0_i32_1 = arith.constant 0 : i32
    return %c0_i32, %c0_i32_0 : i32, i32
  }
  func.func @transform_7(%arg0: i32) -> (i32, i32) {
    %c0_i32 = arith.constant 0 : i32
    %c0_i32_0 = arith.constant 0 : i32
    %c0_i32_1 = arith.constant 0 : i32
    return %c0_i32, %c0_i32_0 : i32, i32
  }
  func.func @transform_8(%arg0: i32) -> (i32, i32) {
    %c0_i32 = arith.constant 0 : i32
    %c0_i32_0 = arith.constant 0 : i32
    return %arg0, %c0_i32 : i32, i32
  }
}

</mosaic_0001>

<llo_original>
// kernel: tile.23
$region0: #{tile.23}
  #allocation2 [shape = 's32[1]{0}', space=sflag, size = 0x4, scoped, tag = 'scoped memory for tile.23']
  %s0 = inlined_call_operand.hbm [shape: f32[32], index: 0, kind: input, shape index: {}]
  %s1 = inlined_call_operand.vmem [shape: f32[4,32], index: 1, kind: output, shape index: {}]
  $region1: #{tile.23} parent=0
    #allocation0 [shape = 'u8[512]{0}', space=vmem, size = 0x400, scoped, tag = 'operand span for operand 0']
    #allocation1 [shape = 's32[1]{0}', space=sflag, size = 0x4, scoped, tag = 'scoped memory for tile.23']
    %2 = vsyncpa [#allocation1], 0
    // Predicated region
    $region2: #{tile.23} parent=1 // pred_check
      _
    $region3: #{tile.23} parent=1 // pred_check_branch
      %4 = sbr.rel (0) target = $region5
    $region4: #{tile.23} parent=1 // pred_region
      %s6 = ssub.s32 16, 16
      %7 = vsyncadd [#allocation1], %s6
      %s9 = sshll.u32 [#allocation0], 4
      %s10 = int_to_ptr.vmem [resolvable:$true] %s9
      %12 = dma.hbm_to_vmem [thread:$0]  %s0, 16, %s10, [#allocation1]
    $region5: #{tile.23} parent=1 // pred_fallthru
      _
    // Predicated region
    $region6: #{tile.23} parent=1 // pred_check
      _
    $region7: #{tile.23} parent=1 // pred_check_branch
      %14 = sbr.rel (0) target = $region9
    $region8: #{tile.23} parent=1 // pred_region
      %15 = dma.done [#allocation1], 16
    $region9: #{tile.23} parent=1 // pred_fallthru
      _
    %v16 = vld [vmem:[#allocation0] ss:$0 sm:$0xff]
    %17 = vst [vmem:[%s1] sm:$0xf] %v16
    %18 = vsyncpa [#allocation1], 1

// kernel: tile.24
$region0: #{tile.24}
  %s0 = inlined_call_operand.vmem [shape: f32[4,32], index: 0, kind: input, shape index: {}]
  %s1 = inlined_call_operand.vmem [shape: f32[1,128], index: 1, kind: output, shape index: {}]
  $region1: #{tile.24} parent=0
    #allocation0 [shape = 'u8[4096]{0}', space=vmem, size = 0x1000, scoped, tag = 'scoped mem for output reshape']
    #allocation1 [shape = 'u8[4096]{0}', space=vmem, size = 0x1000, scoped, tag = 'scoped mem for input reshape']
    %s3 = sshll.u32 1, 4
    %s4 = ssub.s32 %s3, 1
    %v5 = vld [vmem:[%s0] sm:%s4]
    %6 = vst [vmem:[#allocation1] sm:%s4] %v5
    %v7 = vld [vmem:[#allocation1] sm:$0x1]
    %vm8 = vcmask 261120
    %9 = vst.msk [vmem:[#allocation0] sm:$0x1] %vm8, %v7
    %s10 = scalar_lea.vmem [#allocation1], 3
    %v11 = vld [vmem:[%s10] sm:$0x1]
    %12 = vrot.lane.b32.xlu0 %v11, 96
    %v13 = vpop.permute.xlu0 %12
    %vm14 = vcmask 1048320
    %15 = vst.msk [vmem:[#allocation0] sm:$0x1] %vm14, %v13
    %s16 = scalar_lea.vmem [#allocation1], 2
    %v17 = vld [vmem:[%s16] sm:$0x1]
    %18 = vrot.lane.b32.xlu0 %v17, 64
    %v19 = vpop.permute.xlu0 %18
    %vm20 = vcmask 785920
    %21 = vst.msk [vmem:[#allocation0] sm:$0x1] %vm20, %v19
    %s22 = scalar_lea.vmem [#allocation1], 1
    %v23 = vld [vmem:[%s22] sm:$0x1]
    %24 = vrot.lane.b32.xlu0 %v23, 32
    %v25 = vpop.permute.xlu0 %24
    %vm26 = vcmask 523520
    %27 = vst.msk [vmem:[#allocation0] sm:$0x1] %vm26, %v25
    %s29 = sshll.u32 1, 1
    %s30 = ssub.s32 %s29, 1
    %v32 = vld [vmem:[#allocation0] sm:%s30]
    %s33 = sshll.u32 1, 1
    %s34 = ssub.s32 %s33, 1
    %35 = vst [vmem:[%s1] sm:%s34] %v32

// kernel: tile.39
$region0: #{tile.39}
  %s0 = inlined_call_operand.vmem [shape: f32[16,32], index: 0, kind: input, shape index: {}]
  %s1 = inlined_call_operand.vmem [shape: f32[1,512], index: 1, kind: output, shape index: {}]
  $region1: #{tile.39} parent=0
    #allocation0 [shape = 'u8[16384]{0}', space=vmem, size = 0x4000, scoped, tag = 'scoped mem for output reshape']
    %v2 = vld [vmem:[%s0] ss:$4 sm:$0xf]
    %vm3 = vcmask 261120
    %4 = vst.msk [vmem:[#allocation0] ss:$8 sm:$0xf] %vm3, %v2
    %s5 = scalar_lea.vmem %s0, 3
    %v6 = vld [vmem:[%s5] ss:$4 sm:$0xf]
    %7 = vrot.lane.b32.xlu0 %v6, 96
    %v8 = vpop.permute.xlu0 %7
    %vm9 = vcmask 1048320
    %10 = vst.msk [vmem:[#allocation0] ss:$8 sm:$0xf] %vm9, %v8
    %s11 = scalar_lea.vmem %s0, 2
    %v12 = vld [vmem:[%s11] ss:$4 sm:$0xf]
    %13 = vrot.lane.b32.xlu0 %v12, 64
    %v14 = vpop.permute.xlu0 %13
    %vm15 = vcmask 785920
    %16 = vst.msk [vmem:[#allocation0] ss:$8 sm:$0xf] %vm15, %v14
    %s17 = scalar_lea.vmem %s0, 1
    %v18 = vld [vmem:[%s17] ss:$4 sm:$0xf]
    %19 = vrot.lane.b32.xlu0 %v18, 32
    %v20 = vpop.permute.xlu0 %19
    %vm21 = vcmask 523520
    %22 = vst.msk [vmem:[#allocation0] ss:$8 sm:$0xf] %vm21, %v20
    %s24 = sshll.u32 1, 1
    %s25 = ssub.s32 %s24, 1
    %v27 = vld [vmem:[#allocation0] sm:%s25]
    %s28 = sshll.u32 1, 1
    %s29 = ssub.s32 %s28, 1
    %30 = vst [vmem:[%s1] sm:%s29] %v27
    %s31 = scalar_lea.vmem [#allocation0], 8
    %v32 = vld [vmem:[%s31] sm:%s25]
    %s33 = sshll.u32 1, 1
    %s34 = ssub.s32 %s33, 1
    %s35 = scalar_lea.vmem %s1, 1
    %36 = vst [vmem:[%s35] sm:%s34] %v32
    %s37 = scalar_lea.vmem [#allocation0], 16
    %v38 = vld [vmem:[%s37] sm:%s25]
    %s39 = sshll.u32 1, 1
    %s40 = ssub.s32 %s39, 1
    %s41 = smul.addr 1, 2
    %s42 = scalar_lea.vmem %s1, %s41
    %43 = vst [vmem:[%s42] sm:%s40] %v38
    %s44 = scalar_lea.vmem [#allocation0], 24
    %v45 = vld [vmem:[%s44] sm:%s25]
    %s46 = sshll.u32 1, 1
    %s47 = ssub.s32 %s46, 1
    %s48 = smul.addr 1, 3
    %s49 = scalar_lea.vmem %s1, %s48
    %50 = vst [vmem:[%s49] sm:%s47] %v45

// kernel: tile.38
$region0: #{tile.38}
  #allocation2 [shape = 's32[1]{0}', space=sflag, size = 0x4, scoped, tag = 'scoped memory for tile.38']
  %s0 = inlined_call_operand.hbm [shape: f32[32], index: 0, kind: input, shape index: {}]
  %s1 = inlined_call_operand.vmem [shape: f32[16,32], index: 1, kind: output, shape index: {}]
  $region1: #{tile.38} parent=0
    #allocation0 [shape = 'u8[512]{0}', space=vmem, size = 0x400, scoped, tag = 'operand span for operand 0']
    #allocation1 [shape = 's32[1]{0}', space=sflag, size = 0x4, scoped, tag = 'scoped memory for tile.38']
    %2 = vsyncpa [#allocation1], 0
    // Predicated region
    $region2: #{tile.38} parent=1 // pred_check
      _
    $region3: #{tile.38} parent=1 // pred_check_branch
      %4 = sbr.rel (0) target = $region5
    $region4: #{tile.38} parent=1 // pred_region
      %s6 = ssub.s32 16, 16
      %7 = vsyncadd [#allocation1], %s6
      %s9 = sshll.u32 [#allocation0], 4
      %s10 = int_to_ptr.vmem [resolvable:$true] %s9
      %12 = dma.hbm_to_vmem [thread:$0]  %s0, 16, %s10, [#allocation1]
    $region5: #{tile.38} parent=1 // pred_fallthru
      _
    // Predicated region
    $region6: #{tile.38} parent=1 // pred_check
      _
    $region7: #{tile.38} parent=1 // pred_check_branch
      %14 = sbr.rel (0) target = $region9
    $region8: #{tile.38} parent=1 // pred_region
      %15 = dma.done [#allocation1], 16
    $region9: #{tile.38} parent=1 // pred_fallthru
      _
    %v16 = vld [vmem:[#allocation0] ss:$0 sm:$0xff]
    %17 = vst [vmem:[%s1] sm:$0xff] %v16
    %s18 = scalar_lea.vmem %s1, 8
    %19 = vst [vmem:[%s18] sm:$0xff] %v16
    %20 = vsyncpa [#allocation1], 1

// kernel: vitup2_forward.1
$region0: #{vitup2_forward.1}
  #allocation0 [shape = 'u32[]', space=smem, size = 0x4, offset = 0x4, fixed_abs, tag = 'smem constant byte address 0x4 - core index']
  #allocation1 [shape = 'u32[144,128]{1,0:T(1,128)}', space=vmem, size = 0x12000, scoped, tag = 'internal scratch']
  %s0 = inlined_call_operand.vmem [shape: f32[128,32], index: 0, kind: input, shape index: {}]
  %s1 = inlined_call_operand.vmem [shape: f32[32,128], index: 1, kind: input, shape index: {}]
  %s2 = inlined_call_operand.vmem [shape: f32[1,128], index: 2, kind: input, shape index: {}]
  %s3 = inlined_call_operand.vmem [shape: f32[1,128], index: 3, kind: input, shape index: {}]
  %s4 = inlined_call_operand.vmem [shape: f32[1,128], index: 4, kind: input, shape index: {}]
  %s5 = inlined_call_operand.vmem [shape: f32[128,128], index: 5, kind: input, shape index: {}]
  %s6 = inlined_call_operand.vmem [shape: f32[128,512], index: 6, kind: input, shape index: {}]
  %s7 = inlined_call_operand.vmem [shape: f32[1,512], index: 7, kind: input, shape index: {}]
  %s8 = inlined_call_operand.vmem [shape: f32[128,512], index: 8, kind: output, shape index: {}]
  %s9 = sld [smem:[#allocation0]]
  $region42: #{vitup2_forward.1} parent=0
    _
  %s11 = ssub.s32 1, %s9
  %s12 = scalar_select 0, %s11, %s9
  // Predicated region
  $region2: #{vitup2_forward.1} parent=0 // pred_check
    _
  $region3: #{vitup2_forward.1} parent=0 // pred_check_branch
    %14 = sbr.rel (0) target = $region5
  $region4: #{vitup2_forward.1} parent=0 // pred_region
    _
  $region5: #{vitup2_forward.1} parent=0 // pred_fallthru
    _
  // Predicated region
  $region6: #{vitup2_forward.1} parent=0 // pred_check
    _
  $region7: #{vitup2_forward.1} parent=0 // pred_check_branch
    %16 = sbr.rel (0) target = $region9
  $region8: #{vitup2_forward.1} parent=0 // pred_region
    _
  $region9: #{vitup2_forward.1} parent=0 // pred_fallthru
    _
  // Predicated region
  $region10: #{vitup2_forward.1} parent=0 // pred_check
    _
  $region11: #{vitup2_forward.1} parent=0 // pred_check_branch
    %18 = sbr.rel (0) target = $region13
  $region12: #{vitup2_forward.1} parent=0 // pred_region
    _
  $region13: #{vitup2_forward.1} parent=0 // pred_fallthru
    _
  // Predicated region
  $region14: #{vitup2_forward.1} parent=0 // pred_check
    _
  $region15: #{vitup2_forward.1} parent=0 // pred_check_branch
    %20 = sbr.rel (0) target = $region17
  $region16: #{vitup2_forward.1} parent=0 // pred_region
    _
  $region17: #{vitup2_forward.1} parent=0 // pred_fallthru
    _
  // Predicated region
  $region18: #{vitup2_forward.1} parent=0 // pred_check
    _
  $region19: #{vitup2_forward.1} parent=0 // pred_check_branch
    %22 = sbr.rel (0) target = $region21
  $region20: #{vitup2_forward.1} parent=0 // pred_region
    _
  $region21: #{vitup2_forward.1} parent=0 // pred_fallthru
    _
  // Predicated region
  $region22: #{vitup2_forward.1} parent=0 // pred_check
    _
  $region23: #{vitup2_forward.1} parent=0 // pred_check_branch
    %24 = sbr.rel (0) target = $region25
  $region24: #{vitup2_forward.1} parent=0 // pred_region
    _
  $region25: #{vitup2_forward.1} parent=0 // pred_fallthru
    _
  // Predicated region
  $region26: #{vitup2_forward.1} parent=0 // pred_check
    _
  $region27: #{vitup2_forward.1} parent=0 // pred_check_branch
    %26 = sbr.rel (0) target = $region29
  $region28: #{vitup2_forward.1} parent=0 // pred_region
    _
  $region29: #{vitup2_forward.1} parent=0 // pred_fallthru
    _
  // Predicated region
  $region30: #{vitup2_forward.1} parent=0 // pred_check
    _
  $region31: #{vitup2_forward.1} parent=0 // pred_check_branch
    %28 = sbr.rel (0) target = $region33
  $region32: #{vitup2_forward.1} parent=0 // pred_region
    _
  $region33: #{vitup2_forward.1} parent=0 // pred_fallthru
    _
  %v29 = vld [vmem:[%s0] sm:$0xff]
  %v30 = vld [vmem:[%s0 + $0x8] sm:$0xff]
  %v31 = vld [vmem:[%s0 + $0x10] sm:$0xff]
  %v32 = vld [vmem:[%s0 + $0x18] sm:$0xff]
  %v33 = vld [vmem:[%s0 + $0x20] sm:$0xff]
  %v34 = vld [vmem:[%s0 + $0x28] sm:$0xff]
  %v35 = vld [vmem:[%s0 + $0x30] sm:$0xff]
  %v36 = vld [vmem:[%s0 + $0x38] sm:$0xff]
  %v37 = vld [vmem:[%s0 + $0x40] sm:$0xff]
  %v38 = vld [vmem:[%s0 + $0x48] sm:$0xff]
  %v39 = vld [vmem:[%s0 + $0x50] sm:$0xff]
  %v40 = vld [vmem:[%s0 + $0x58] sm:$0xff]
  %v41 = vld [vmem:[%s0 + $0x60] sm:$0xff]
  %v42 = vld [vmem:[%s0 + $0x68] sm:$0xff]
  %v43 = vld [vmem:[%s0 + $0x70] sm:$0xff]
  %v44 = vld [vmem:[%s0 + $0x78] sm:$0xff]
  %v45 = vld [vmem:[%s1] sm:$0xff]
  %v46 = vld [vmem:[%s1 + $0x8] sm:$0xff]
  %v47 = vld [vmem:[%s1 + $0x10] sm:$0xff]
  %v48 = vld [vmem:[%s1 + $0x18] sm:$0xff]
  %v49 = vld [vmem:[%s2] sm:$0x1]
  %v51 = vlaneseq
  %v52 = vshrl.u32 %v51, 7
  %v53 = vsub.s32 0, %v52
  %v54 = vrot.slane %v49, %v53
  %vm56 = vcmask 261120
  %v58 = vsel %vm56, %v29, 0
  %v61 = vsel %vm56, %v30, 0
  %v64 = vsel %vm56, %v31, 0
  %v67 = vsel %vm56, %v32, 0
  %v70 = vsel %vm56, %v33, 0
  %v73 = vsel %vm56, %v34, 0
  %v76 = vsel %vm56, %v35, 0
  %v79 = vsel %vm56, %v36, 0
  %v82 = vsel %vm56, %v37, 0
  %v85 = vsel %vm56, %v38, 0
  %v88 = vsel %vm56, %v39, 0
  %v91 = vsel %vm56, %v40, 0
  %v94 = vsel %vm56, %v41, 0
  %v97 = vsel %vm56, %v42, 0
  %v100 = vsel %vm56, %v43, 0
  %v103 = vsel %vm56, %v44, 0
  %105 = vmatprep.subr.mxu0 0.0
  %106 = vmatpush1.msra.mxu0 0.0
  %107 = vmatprep.subr.mxu0 0.0
  %108 = vmatpush1.msra.mxu0 0.0
  %109 = vmatprep.subr.mxu0 0.0
  %110 = vmatpush1.msra.mxu0 0.0
  %111 = vmatprep.subr.mxu0 0.0
  %112 = vmatpush1.msra.mxu0 0.0
  %113 = vmatprep.subr.mxu0 0.0
  %114 = vmatpush1.msra.mxu0 0.0
  %115 = vmatprep.subr.mxu0 0.0
  %116 = vmatpush1.msra.mxu0 0.0
  %117 = vmatprep.subr.mxu0 0.0
  %118 = vmatpush1.msra.mxu0 0.0
  %119 = vmatprep.subr.mxu0 0.0
  %120 = vmatpush1.msra.mxu0 0.0
  %121 = vmatprep.subr.mxu0 0.0
  %122 = vmatpush1.msra.mxu0 0.0
  %123 = vmatprep.subr.mxu0 0.0
  %124 = vmatpush1.msra.mxu0 0.0
  %125 = vmatprep.subr.mxu0 0.0
  %126 = vmatpush1.msra.mxu0 0.0
  %127 = vmatprep.subr.mxu0 0.0
  %128 = vmatpush1.msra.mxu0 0.0
  %129 = vmatprep.subr.mxu0 0.0
  %130 = vmatpush1.msra.mxu0 %v48
  %131 = vmatprep.subr.mxu0 0.0
  %132 = vmatpush1.msra.mxu0 %v47
  %133 = vmatprep.subr.mxu0 0.0
  %134 = vmatpush1.msra.mxu0 %v46
  %135 = vmatprep.subr.mxu0 0.0
  %136 = vmatpush1.msra.mxu0 %v45
  %137 = vmatprep.subr.mxu0 0.0
  %138 = vmatpush2.msra.mxu0 0.0
  %139 = vmatprep.subr.mxu0 0.0
  %140 = vmatpush2.msra.mxu0 0.0
  %141 = vmatprep.subr.mxu0 0.0
  %142 = vmatpush2.msra.mxu0 0.0
  %143 = vmatprep.subr.mxu0 0.0
  %144 = vmatpush2.msra.mxu0 0.0
  %145 = vmatprep.subr.mxu0 0.0
  %146 = vmatpush2.msra.mxu0 0.0
  %147 = vmatprep.subr.mxu0 0.0
  %148 = vmatpush2.msra.mxu0 0.0
  %149 = vmatprep.subr.mxu0 0.0
  %150 = vmatpush2.msra.mxu0 0.0
  %151 = vmatprep.subr.mxu0 0.0
  %152 = vmatpush2.msra.mxu0 0.0
  %153 = vmatprep.subr.mxu0 0.0
  %154 = vmatpush2.msra.mxu0 0.0
  %155 = vmatprep.subr.mxu0 0.0
  %156 = vmatpush2.msra.mxu0 0.0
  %157 = vmatprep.subr.mxu0 0.0
  %158 = vmatpush2.msra.mxu0 0.0
  %159 = vmatprep.subr.mxu0 0.0
  %160 = vmatpush2.msra.mxu0 0.0
  %161 = vmatprep.subr.mxu0 0.0
  %162 = vmatpush2.msra.mxu0 0.0
  %163 = vmatprep.subr.mxu0 0.0
  %164 = vmatpush2.msra.mxu0 0.0
  %165 = vmatprep.subr.mxu0 0.0
  %166 = vmatpush2.msra.mxu0 0.0
  %167 = vmatprep.subr.mxu0 0.0
  %168 = vmatpush2.msra.mxu0 0.0
  %169 = vmatprep.mubr.f32.mxu0 0.0
  %170 = vmatmul.mubr.f32.gmra.mxu0 %v58
  %v171 = vpop.f32.mrf.mxu0
  %v172 = vadd.f32 %v54, %v171
  %v173 = vpop.f32.mrf.mxu0
  %174 = vmatprep.mubr.f32.mxu0 0.0
  %175 = vmatmul.mubr.f32.gmra.mxu0 %v61
  %v176 = vpop.f32.mrf.mxu0
  %v177 = vadd.f32 %v54, %v176
  %v178 = vpop.f32.mrf.mxu0
  %179 = vmatprep.mubr.f32.mxu0 0.0
  %180 = vmatmul.mubr.f32.gmra.mxu0 %v64
  %v181 = vpop.f32.mrf.mxu0
  %v182 = vadd.f32 %v54, %v181
  %v183 = vpop.f32.mrf.mxu0
  %184 = vmatprep.mubr.f32.mxu0 0.0
  %185 = vmatmul.mubr.f32.gmra.mxu0 %v67
  %v186 = vpop.f32.mrf.mxu0
  %v187 = vadd.f32 %v54, %v186
  %v188 = vpop.f32.mrf.mxu0
  %189 = vmatprep.mubr.f32.mxu0 0.0
  %190 = vmatmul.mubr.f32.gmra.mxu0 %v70
  %v191 = vpop.f32.mrf.mxu0
  %v192 = vadd.f32 %v54, %v191
  %v193 = vpop.f32.mrf.mxu0
  %194 = vmatprep.mubr.f32.mxu0 0.0
  %195 = vmatmul.mubr.f32.gmra.mxu0 %v73
  %v196 = vpop.f32.mrf.mxu0
  %v197 = vadd.f32 %v54, %v196
  %v198 = vpop.f32.mrf.mxu0
  %199 = vmatprep.mubr.f32.mxu0 0.0
  %200 = vmatmul.mubr.f32.gmra.mxu0 %v76
  %v201 = vpop.f32.mrf.mxu0
  %v202 = vadd.f32 %v54, %v201
  %v203 = vpop.f32.mrf.mxu0
  %204 = vmatprep.mubr.f32.mxu0 0.0
  %205 = vmatmul.mubr.f32.gmra.mxu0 %v79
  %v206 = vpop.f32.mrf.mxu0
  %v207 = vadd.f32 %v54, %v206
  %v208 = vpop.f32.mrf.mxu0
  %209 = vmatprep.mubr.f32.mxu0 0.0
  %210 = vmatmul.mubr.f32.gmra.mxu0 %v82
  %v211 = vpop.f32.mrf.mxu0
  %v212 = vadd.f32 %v54, %v211
  %v213 = vpop.f32.mrf.mxu0
  %214 = vmatprep.mubr.f32.mxu0 0.0
  %215 = vmatmul.mubr.f32.gmra.mxu0 %v85
  %v216 = vpop.f32.mrf.mxu0
  %v217 = vadd.f32 %v54, %v216
  %v218 = vpop.f32.mrf.mxu0
  %219 = vmatprep.mubr.f32.mxu0 0.0
  %220 = vmatmul.mubr.f32.gmra.mxu0 %v88
  %v221 = vpop.f32.mrf.mxu0
  %v222 = vadd.f32 %v54, %v221
  %v223 = vpop.f32.mrf.mxu0
  %224 = vmatprep.mubr.f32.mxu0 0.0
  %225 = vmatmul.mubr.f32.gmra.mxu0 %v91
  %v226 = vpop.f32.mrf.mxu0
  %v227 = vadd.f32 %v54, %v226
  %v228 = vpop.f32.mrf.mxu0
  %229 = vmatprep.mubr.f32.mxu0 0.0
  %230 = vmatmul.mubr.f32.gmra.mxu0 %v94
  %v231 = vpop.f32.mrf.mxu0
  %v232 = vadd.f32 %v54, %v231
  %v233 = vpop.f32.mrf.mxu0
  %234 = vmatprep.mubr.f32.mxu0 0.0
  %235 = vmatmul.mubr.f32.gmra.mxu0 %v97
  %v236 = vpop.f32.mrf.mxu0
  %v237 = vadd.f32 %v54, %v236
  %v238 = vpop.f32.mrf.mxu0
  %239 = vmatprep.mubr.f32.mxu0 0.0
  %240 = vmatmul.mubr.f32.gmra.mxu0 %v100
  %v241 = vpop.f32.mrf.mxu0
  %v242 = vadd.f32 %v54, %v241
  %v243 = vpop.f32.mrf.mxu0
  %244 = vmatprep.mubr.f32.mxu0 0.0
  %245 = vmatmul.mubr.f32.gmra.mxu0 %v103
  %v246 = vpop.f32.mrf.mxu0
  %v247 = vadd.f32 %v54, %v246
  %v248 = vpop.f32.mrf.mxu0
  %249 = vdwg.mxu0
  %v250 = vld [vmem:[%s5] sm:$0xff]
  %v251 = vld [vmem:[%s5 + $0x8] sm:$0xff]
  %v252 = vld [vmem:[%s5 + $0x10] sm:$0xff]
  %v253 = vld [vmem:[%s5 + $0x18] sm:$0xff]
  %v254 = vld [vmem:[%s5 + $0x20] sm:$0xff]
  %v255 = vld [vmem:[%s5 + $0x28] sm:$0xff]
  %v256 = vld [vmem:[%s5 + $0x30] sm:$0xff]
  %v257 = vld [vmem:[%s5 + $0x38] sm:$0xff]
  %v258 = vld [vmem:[%s5 + $0x40] sm:$0xff]
  %v259 = vld [vmem:[%s5 + $0x48] sm:$0xff]
  %v260 = vld [vmem:[%s5 + $0x50] sm:$0xff]
  %v261 = vld [vmem:[%s5 + $0x58] sm:$0xff]
  %v262 = vld [vmem:[%s5 + $0x60] sm:$0xff]
  %v263 = vld [vmem:[%s5 + $0x68] sm:$0xff]
  %v264 = vld [vmem:[%s5 + $0x70] sm:$0xff]
  %v265 = vld [vmem:[%s5 + $0x78] sm:$0xff]
  %266 = vmatprep.subr.mxu0 0.0
  %267 = vmatpush1.msra.mxu0 %v265
  %268 = vmatprep.subr.mxu0 0.0
  %269 = vmatpush1.msra.mxu0 %v264
  %270 = vmatprep.subr.mxu0 0.0
  %271 = vmatpush1.msra.mxu0 %v263
  %272 = vmatprep.subr.mxu0 0.0
  %273 = vmatpush1.msra.mxu0 %v262
  %274 = vmatprep.subr.mxu0 0.0
  %275 = vmatpush1.msra.mxu0 %v261
  %276 = vmatprep.subr.mxu0 0.0
  %277 = vmatpush1.msra.mxu0 %v260
  %278 = vmatprep.subr.mxu0 0.0
  %279 = vmatpush1.msra.mxu0 %v259
  %280 = vmatprep.subr.mxu0 0.0
  %281 = vmatpush1.msra.mxu0 %v258
  %282 = vmatprep.subr.mxu0 0.0
  %283 = vmatpush1.msra.mxu0 %v257
  %284 = vmatprep.subr.mxu0 0.0
  %285 = vmatpush1.msra.mxu0 %v256
  %286 = vmatprep.subr.mxu0 0.0
  %287 = vmatpush1.msra.mxu0 %v255
  %288 = vmatprep.subr.mxu0 0.0
  %289 = vmatpush1.msra.mxu0 %v254
  %290 = vmatprep.subr.mxu0 0.0
  %291 = vmatpush1.msra.mxu0 %v253
  %292 = vmatprep.subr.mxu0 0.0
  %293 = vmatpush1.msra.mxu0 %v252
  %294 = vmatprep.subr.mxu0 0.0
  %295 = vmatpush1.msra.mxu0 %v251
  %296 = vmatprep.subr.mxu0 0.0
  %297 = vmatpush1.msra.mxu0 %v250
  %298 = vmatprep.subr.mxu0 0.0
  %299 = vmatpush2.msra.mxu0 0.0
  %300 = vmatprep.subr.mxu0 0.0
  %301 = vmatpush2.msra.mxu0 0.0
  %302 = vmatprep.subr.mxu0 0.0
  %303 = vmatpush2.msra.mxu0 0.0
  %304 = vmatprep.subr.mxu0 0.0
  %305 = vmatpush2.msra.mxu0 0.0
  %306 = vmatprep.subr.mxu0 0.0
  %307 = vmatpush2.msra.mxu0 0.0
  %308 = vmatprep.subr.mxu0 0.0
  %309 = vmatpush2.msra.mxu0 0.0
  %310 = vmatprep.subr.mxu0 0.0
  %311 = vmatpush2.msra.mxu0 0.0
  %312 = vmatprep.subr.mxu0 0.0
  %313 = vmatpush2.msra.mxu0 0.0
  %314 = vmatprep.subr.mxu0 0.0
  %315 = vmatpush2.msra.mxu0 0.0
  %316 = vmatprep.subr.mxu0 0.0
  %317 = vmatpush2.msra.mxu0 0.0
  %318 = vmatprep.subr.mxu0 0.0
  %319 = vmatpush2.msra.mxu0 0.0
  %320 = vmatprep.subr.mxu0 0.0
  %321 = vmatpush2.msra.mxu0 0.0
  %322 = vmatprep.subr.mxu0 0.0
  %323 = vmatpush2.msra.mxu0 0.0
  %324 = vmatprep.subr.mxu0 0.0
  %325 = vmatpush2.msra.mxu0 0.0
  %326 = vmatprep.subr.mxu0 0.0
  %327 = vmatpush2.msra.mxu0 0.0
  %328 = vmatprep.subr.mxu0 0.0
  %329 = vmatpush2.msra.mxu0 0.0
  %330 = vmatprep.mubr.f32.mxu0 0.0
  %331 = vmatmul.mubr.f32.gmra.mxu0 %v172
  %v332 = vpop.f32.mrf.mxu0
  %v333 = vadd.f32 0.0, %v332
  %v334 = vpop.f32.mrf.mxu0
  %335 = vmatprep.mubr.f32.mxu0 0.0
  %336 = vmatmul.mubr.f32.gmra.mxu0 %v177
  %v337 = vpop.f32.mrf.mxu0
  %v338 = vadd.f32 0.0, %v337
  %v339 = vpop.f32.mrf.mxu0
  %340 = vmatprep.mubr.f32.mxu0 0.0
  %341 = vmatmul.mubr.f32.gmra.mxu0 %v182
  %v342 = vpop.f32.mrf.mxu0
  %v343 = vadd.f32 0.0, %v342
  %v344 = vpop.f32.mrf.mxu0
  %345 = vmatprep.mubr.f32.mxu0 0.0
  %346 = vmatmul.mubr.f32.gmra.mxu0 %v187
  %v347 = vpop.f32.mrf.mxu0
  %v348 = vadd.f32 0.0, %v347
  %v349 = vpop.f32.mrf.mxu0
  %350 = vmatprep.mubr.f32.mxu0 0.0
  %351 = vmatmul.mubr.f32.gmra.mxu0 %v192
  %v352 = vpop.f32.mrf.mxu0
  %v353 = vadd.f32 0.0, %v352
  %v354 = vpop.f32.mrf.mxu0
  %355 = vmatprep.mubr.f32.mxu0 0.0
  %356 = vmatmul.mubr.f32.gmra.mxu0 %v197
  %v357 = vpop.f32.mrf.mxu0
  %v358 = vadd.f32 0.0, %v357
  %v359 = vpop.f32.mrf.mxu0
  %360 = vmatprep.mubr.f32.mxu0 0.0
  %361 = vmatmul.mubr.f32.gmra.mxu0 %v202
  %v362 = vpop.f32.mrf.mxu0
  %v363 = vadd.f32 0.0, %v362
  %v364 = vpop.f32.mrf.mxu0
  %365 = vmatprep.mubr.f32.mxu0 0.0
  %366 = vmatmul.mubr.f32.gmra.mxu0 %v207
  %v367 = vpop.f32.mrf.mxu0
  %v368 = vadd.f32 0.0, %v367
  %v369 = vpop.f32.mrf.mxu0
  %370 = vmatprep.mubr.f32.mxu0 0.0
  %371 = vmatmul.mubr.f32.gmra.mxu0 %v212
  %v372 = vpop.f32.mrf.mxu0
  %v373 = vadd.f32 0.0, %v372
  %v374 = vpop.f32.mrf.mxu0
  %375 = vmatprep.mubr.f32.mxu0 0.0
  %376 = vmatmul.mubr.f32.gmra.mxu0 %v217
  %v377 = vpop.f32.mrf.mxu0
  %v378 = vadd.f32 0.0, %v377
  %v379 = vpop.f32.mrf.mxu0
  %380 = vmatprep.mubr.f32.mxu0 0.0
  %381 = vmatmul.mubr.f32.gmra.mxu0 %v222
  %v382 = vpop.f32.mrf.mxu0
  %v383 = vadd.f32 0.0, %v382
  %v384 = vpop.f32.mrf.mxu0
  %385 = vmatprep.mubr.f32.mxu0 0.0
  %386 = vmatmul.mubr.f32.gmra.mxu0 %v227
  %v387 = vpop.f32.mrf.mxu0
  %v388 = vadd.f32 0.0, %v387
  %v389 = vpop.f32.mrf.mxu0
  %390 = vmatprep.mubr.f32.mxu0 0.0
  %391 = vmatmul.mubr.f32.gmra.mxu0 %v232
  %v392 = vpop.f32.mrf.mxu0
  %v393 = vadd.f32 0.0, %v392
  %v394 = vpop.f32.mrf.mxu0
  %395 = vmatprep.mubr.f32.mxu0 0.0
  %396 = vmatmul.mubr.f32.gmra.mxu0 %v237
  %v397 = vpop.f32.mrf.mxu0
  %v398 = vadd.f32 0.0, %v397
  %v399 = vpop.f32.mrf.mxu0
  %400 = vmatprep.mubr.f32.mxu0 0.0
  %401 = vmatmul.mubr.f32.gmra.mxu0 %v242
  %v402 = vpop.f32.mrf.mxu0
  %v403 = vadd.f32 0.0, %v402
  %v404 = vpop.f32.mrf.mxu0
  %405 = vmatprep.mubr.f32.mxu0 0.0
  %406 = vmatmul.mubr.f32.gmra.mxu0 %v247
  %v407 = vpop.f32.mrf.mxu0
  %v408 = vadd.f32 0.0, %v407
  %v409 = vpop.f32.mrf.mxu0
  %410 = vdwg.mxu0
  %v411 = vmul.f32 %v333, 0.03125
  %v412 = vmul.f32 %v338, 0.03125
  %v413 = vmul.f32 %v343, 0.03125
  %v414 = vmul.f32 %v348, 0.03125
  %v415 = vmul.f32 %v353, 0.03125
  %v416 = vmul.f32 %v358, 0.03125
  %v417 = vmul.f32 %v363, 0.03125
  %v418 = vmul.f32 %v368, 0.03125
  %v419 = vmul.f32 %v373, 0.03125
  %v420 = vmul.f32 %v378, 0.03125
  %v421 = vmul.f32 %v383, 0.03125
  %v422 = vmul.f32 %v388, 0.03125
  %v423 = vmul.f32 %v393, 0.03125
  %v424 = vmul.f32 %v398, 0.03125
  %v425 = vmul.f32 %v403, 0.03125
  %v426 = vmul.f32 %v408, 0.03125
  %v427 = vsub.f32 %v172, %v411
  %v428 = vsub.f32 %v177, %v412
  %v429 = vsub.f32 %v182, %v413
  %v430 = vsub.f32 %v187, %v414
  %v431 = vsub.f32 %v192, %v415
  %v432 = vsub.f32 %v197, %v416
  %v433 = vsub.f32 %v202, %v417
  %v434 = vsub.f32 %v207, %v418
  %v435 = vsub.f32 %v212, %v419
  %v436 = vsub.f32 %v217, %v420
  %v437 = vsub.f32 %v222, %v421
  %v438 = vsub.f32 %v227, %v422
  %v439 = vsub.f32 %v232, %v423
  %v440 = vsub.f32 %v237, %v424
  %v441 = vsub.f32 %v242, %v425
  %v442 = vsub.f32 %v247, %v426
  %v443 = vmul.f32 %v427, %v427
  %v444 = vmul.f32 %v428, %v428
  %v445 = vmul.f32 %v429, %v429
  %v446 = vmul.f32 %v430, %v430
  %v447 = vmul.f32 %v431, %v431
  %v448 = vmul.f32 %v432, %v432
  %v449 = vmul.f32 %v433, %v433
  %v450 = vmul.f32 %v434, %v434
  %v451 = vmul.f32 %v435, %v435
  %v452 = vmul.f32 %v436, %v436
  %v453 = vmul.f32 %v437, %v437
  %v454 = vmul.f32 %v438, %v438
  %v455 = vmul.f32 %v439, %v439
  %v456 = vmul.f32 %v440, %v440
  %v457 = vmul.f32 %v441, %v441
  %v458 = vmul.f32 %v442, %v442
  %459 = vmatprep.subr.mxu0 0.0
  %460 = vmatpush1.msra.mxu0 %v265
  %461 = vmatprep.subr.mxu0 0.0
  %462 = vmatpush1.msra.mxu0 %v264
  %463 = vmatprep.subr.mxu0 0.0
  %464 = vmatpush1.msra.mxu0 %v263
  %465 = vmatprep.subr.mxu0 0.0
  %466 = vmatpush1.msra.mxu0 %v262
  %467 = vmatprep.subr.mxu0 0.0
  %468 = vmatpush1.msra.mxu0 %v261
  %469 = vmatprep.subr.mxu0 0.0
  %470 = vmatpush1.msra.mxu0 %v260
  %471 = vmatprep.subr.mxu0 0.0
  %472 = vmatpush1.msra.mxu0 %v259
  %473 = vmatprep.subr.mxu0 0.0
  %474 = vmatpush1.msra.mxu0 %v258
  %475 = vmatprep.subr.mxu0 0.0
  %476 = vmatpush1.msra.mxu0 %v257
  %477 = vmatprep.subr.mxu0 0.0
  %478 = vmatpush1.msra.mxu0 %v256
  %479 = vmatprep.subr.mxu0 0.0
  %480 = vmatpush1.msra.mxu0 %v255
  %481 = vmatprep.subr.mxu0 0.0
  %482 = vmatpush1.msra.mxu0 %v254
  %483 = vmatprep.subr.mxu0 0.0
  %484 = vmatpush1.msra.mxu0 %v253
  %485 = vmatprep.subr.mxu0 0.0
  %486 = vmatpush1.msra.mxu0 %v252
  %487 = vmatprep.subr.mxu0 0.0
  %488 = vmatpush1.msra.mxu0 %v251
  %489 = vmatprep.subr.mxu0 0.0
  %490 = vmatpush1.msra.mxu0 %v250
  %491 = vmatprep.subr.mxu0 0.0
  %492 = vmatpush2.msra.mxu0 0.0
  %493 = vmatprep.subr.mxu0 0.0
  %494 = vmatpush2.msra.mxu0 0.0
  %495 = vmatprep.subr.mxu0 0.0
  %496 = vmatpush2.msra.mxu0 0.0
  %497 = vmatprep.subr.mxu0 0.0
  %498 = vmatpush2.msra.mxu0 0.0
  %499 = vmatprep.subr.mxu0 0.0
  %500 = vmatpush2.msra.mxu0 0.0
  %501 = vmatprep.subr.mxu0 0.0
  %502 = vmatpush2.msra.mxu0 0.0
  %503 = vmatprep.subr.mxu0 0.0
  %504 = vmatpush2.msra.mxu0 0.0
  %505 = vmatprep.subr.mxu0 0.0
  %506 = vmatpush2.msra.mxu0 0.0
  %507 = vmatprep.subr.mxu0 0.0
  %508 = vmatpush2.msra.mxu0 0.0
  %509 = vmatprep.subr.mxu0 0.0
  %510 = vmatpush2.msra.mxu0 0.0
  %511 = vmatprep.subr.mxu0 0.0
  %512 = vmatpush2.msra.mxu0 0.0
  %513 = vmatprep.subr.mxu0 0.0
  %514 = vmatpush2.msra.mxu0 0.0
  %515 = vmatprep.subr.mxu0 0.0
  %516 = vmatpush2.msra.mxu0 0.0
  %517 = vmatprep.subr.mxu0 0.0
  %518 = vmatpush2.msra.mxu0 0.0
  %519 = vmatprep.subr.mxu0 0.0
  %520 = vmatpush2.msra.mxu0 0.0
  %521 = vmatprep.subr.mxu0 0.0
  %522 = vmatpush2.msra.mxu0 0.0
  %523 = vmatprep.mubr.f32.mxu0 0.0
  %524 = vmatmul.mubr.f32.gmra.mxu0 %v443
  %v525 = vpop.f32.mrf.mxu0
  %v526 = vadd.f32 0.0, %v525
  %v527 = vpop.f32.mrf.mxu0
  %528 = vmatprep.mubr.f32.mxu0 0.0
  %529 = vmatmul.mubr.f32.gmra.mxu0 %v444
  %v530 = vpop.f32.mrf.mxu0
  %v531 = vadd.f32 0.0, %v530
  %v532 = vpop.f32.mrf.mxu0
  %533 = vmatprep.mubr.f32.mxu0 0.0
  %534 = vmatmul.mubr.f32.gmra.mxu0 %v445
  %v535 = vpop.f32.mrf.mxu0
  %v536 = vadd.f32 0.0, %v535
  %v537 = vpop.f32.mrf.mxu0
  %538 = vmatprep.mubr.f32.mxu0 0.0
  %539 = vmatmul.mubr.f32.gmra.mxu0 %v446
  %v540 = vpop.f32.mrf.mxu0
  %v541 = vadd.f32 0.0, %v540
  %v542 = vpop.f32.mrf.mxu0
  %543 = vmatprep.mubr.f32.mxu0 0.0
  %544 = vmatmul.mubr.f32.gmra.mxu0 %v447
  %v545 = vpop.f32.mrf.mxu0
  %v546 = vadd.f32 0.0, %v545
  %v547 = vpop.f32.mrf.mxu0
  %548 = vmatprep.mubr.f32.mxu0 0.0
  %549 = vmatmul.mubr.f32.gmra.mxu0 %v448
  %v550 = vpop.f32.mrf.mxu0
  %v551 = vadd.f32 0.0, %v550
  %v552 = vpop.f32.mrf.mxu0
  %553 = vmatprep.mubr.f32.mxu0 0.0
  %554 = vmatmul.mubr.f32.gmra.mxu0 %v449
  %v555 = vpop.f32.mrf.mxu0
  %v556 = vadd.f32 0.0, %v555
  %v557 = vpop.f32.mrf.mxu0
  %558 = vmatprep.mubr.f32.mxu0 0.0
  %559 = vmatmul.mubr.f32.gmra.mxu0 %v450
  %v560 = vpop.f32.mrf.mxu0
  %v561 = vadd.f32 0.0, %v560
  %v562 = vpop.f32.mrf.mxu0
  %563 = vmatprep.mubr.f32.mxu0 0.0
  %564 = vmatmul.mubr.f32.gmra.mxu0 %v451
  %v565 = vpop.f32.mrf.mxu0
  %v566 = vadd.f32 0.0, %v565
  %v567 = vpop.f32.mrf.mxu0
  %568 = vmatprep.mubr.f32.mxu0 0.0
  %569 = vmatmul.mubr.f32.gmra.mxu0 %v452
  %v570 = vpop.f32.mrf.mxu0
  %v571 = vadd.f32 0.0, %v570
  %v572 = vpop.f32.mrf.mxu0
  %573 = vmatprep.mubr.f32.mxu0 0.0
  %574 = vmatmul.mubr.f32.gmra.mxu0 %v453
  %v575 = vpop.f32.mrf.mxu0
  %v576 = vadd.f32 0.0, %v575
  %v577 = vpop.f32.mrf.mxu0
  %578 = vmatprep.mubr.f32.mxu0 0.0
  %579 = vmatmul.mubr.f32.gmra.mxu0 %v454
  %v580 = vpop.f32.mrf.mxu0
  %v581 = vadd.f32 0.0, %v580
  %v582 = vpop.f32.mrf.mxu0
  %583 = vmatprep.mubr.f32.mxu0 0.0
  %584 = vmatmul.mubr.f32.gmra.mxu0 %v455
  %v585 = vpop.f32.mrf.mxu0
  %v586 = vadd.f32 0.0, %v585
  %v587 = vpop.f32.mrf.mxu0
  %588 = vmatprep.mubr.f32.mxu0 0.0
  %589 = vmatmul.mubr.f32.gmra.mxu0 %v456
  %v590 = vpop.f32.mrf.mxu0
  %v591 = vadd.f32 0.0, %v590
  %v592 = vpop.f32.mrf.mxu0
  %593 = vmatprep.mubr.f32.mxu0 0.0
  %594 = vmatmul.mubr.f32.gmra.mxu0 %v457
  %v595 = vpop.f32.mrf.mxu0
  %v596 = vadd.f32 0.0, %v595
  %v597 = vpop.f32.mrf.mxu0
  %598 = vmatprep.mubr.f32.mxu0 0.0
  %599 = vmatmul.mubr.f32.gmra.mxu0 %v458
  %v600 = vpop.f32.mrf.mxu0
  %v601 = vadd.f32 0.0, %v600
  %v602 = vpop.f32.mrf.mxu0
  %603 = vdwg.mxu0
  %v604 = vmul.f32 %v526, 0.03125
  %v605 = vmul.f32 %v531, 0.03125
  %v606 = vmul.f32 %v536, 0.03125
  %v607 = vmul.f32 %v541, 0.03125
  %v608 = vmul.f32 %v546, 0.03125
  %v609 = vmul.f32 %v551, 0.03125
  %v610 = vmul.f32 %v556, 0.03125
  %v611 = vmul.f32 %v561, 0.03125
  %v612 = vmul.f32 %v566, 0.03125
  %v613 = vmul.f32 %v571, 0.03125
  %v614 = vmul.f32 %v576, 0.03125
  %v615 = vmul.f32 %v581, 0.03125
  %v616 = vmul.f32 %v586, 0.03125
  %v617 = vmul.f32 %v591, 0.03125
  %v618 = vmul.f32 %v596, 0.03125
  %v619 = vmul.f32 %v601, 0.03125
  %v620 = vadd.f32 %v604, 1e-06
  %v621 = vadd.f32 %v605, 1e-06
  %v622 = vadd.f32 %v606, 1e-06
  %v623 = vadd.f32 %v607, 1e-06
  %v624 = vadd.f32 %v608, 1e-06
  %v625 = vadd.f32 %v609, 1e-06
  %v626 = vadd.f32 %v610, 1e-06
  %v627 = vadd.f32 %v611, 1e-06
  %v628 = vadd.f32 %v612, 1e-06
  %v629 = vadd.f32 %v613, 1e-06
  %v630 = vadd.f32 %v614, 1e-06
  %v631 = vadd.f32 %v615, 1e-06
  %v632 = vadd.f32 %v616, 1e-06
  %v633 = vadd.f32 %v617, 1e-06
  %v634 = vadd.f32 %v618, 1e-06
  %v635 = vadd.f32 %v619, 1e-06
  %v636 = vrsqrt.pop %v620
  %v637 = vrsqrt.pop %v621
  %v638 = vrsqrt.pop %v622
  %v639 = vrsqrt.pop %v623
  %v640 = vrsqrt.pop %v624
  %v641 = vrsqrt.pop %v625
  %v642 = vrsqrt.pop %v626
  %v643 = vrsqrt.pop %v627
  %v644 = vrsqrt.pop %v628
  %v645 = vrsqrt.pop %v629
  %v646 = vrsqrt.pop %v630
  %v647 = vrsqrt.pop %v631
  %v648 = vrsqrt.pop %v632
  %v649 = vrsqrt.pop %v633
  %v650 = vrsqrt.pop %v634
  %v651 = vrsqrt.pop %v635
  %v652 = vmul.f32 %v427, %v636
  %v653 = vmul.f32 %v428, %v637
  %v654 = vmul.f32 %v429, %v638
  %v655 = vmul.f32 %v430, %v639
  %v656 = vmul.f32 %v431, %v640
  %v657 = vmul.f32 %v432, %v641
  %v658 = vmul.f32 %v433, %v642
  %v659 = vmul.f32 %v434, %v643
  %v660 = vmul.f32 %v435, %v644
  %v661 = vmul.f32 %v436, %v645
  %v662 = vmul.f32 %v437, %v646
  %v663 = vmul.f32 %v438, %v647
  %v664 = vmul.f32 %v439, %v648
  %v665 = vmul.f32 %v440, %v649
  %v666 = vmul.f32 %v441, %v650
  %v667 = vmul.f32 %v442, %v651
  %v668 = vld [vmem:[%s3] sm:$0x1]
  %v670 = vlaneseq
  %v671 = vshrl.u32 %v670, 7
  %v672 = vsub.s32 0, %v671
  %v673 = vrot.slane %v668, %v672
  %v675 = vmul.f32 %v652, %v673
  %v676 = vmul.f32 %v653, %v673
  %v677 = vmul.f32 %v654, %v673
  %v678 = vmul.f32 %v655, %v673
  %v679 = vmul.f32 %v656, %v673
  %v680 = vmul.f32 %v657, %v673
  %v681 = vmul.f32 %v658, %v673
  %v682 = vmul.f32 %v659, %v673
  %v683 = vmul.f32 %v660, %v673
  %v684 = vmul.f32 %v661, %v673
  %v685 = vmul.f32 %v662, %v673
  %v686 = vmul.f32 %v663, %v673
  %v687 = vmul.f32 %v664, %v673
  %v688 = vmul.f32 %v665, %v673
  %v689 = vmul.f32 %v666, %v673
  %v690 = vmul.f32 %v667, %v673
  %v691 = vld [vmem:[%s4] sm:$0x1]
  %v693 = vlaneseq
  %v694 = vshrl.u32 %v693, 7
  %v695 = vsub.s32 0, %v694
  %v696 = vrot.slane %v691, %v695
  %v698 = vadd.f32 %v675, %v696
  %v699 = vadd.f32 %v676, %v696
  %v700 = vadd.f32 %v677, %v696
  %v701 = vadd.f32 %v678, %v696
  %v702 = vadd.f32 %v679, %v696
  %v703 = vadd.f32 %v680, %v696
  %v704 = vadd.f32 %v681, %v696
  %v705 = vadd.f32 %v682, %v696
  %v706 = vadd.f32 %v683, %v696
  %v707 = vadd.f32 %v684, %v696
  %v708 = vadd.f32 %v685, %v696
  %v709 = vadd.f32 %v686, %v696
  %v710 = vadd.f32 %v687, %v696
  %v711 = vadd.f32 %v688, %v696
  %v712 = vadd.f32 %v689, %v696
  %v713 = vadd.f32 %v690, %v696
  %v714 = vmul.f32 %v698, 0.5
  %v715 = vmul.f32 %v699, 0.5
  %v716 = vmul.f32 %v700, 0.5
  %v717 = vmul.f32 %v701, 0.5
  %v718 = vmul.f32 %v702, 0.5
  %v719 = vmul.f32 %v703, 0.5
  %v720 = vmul.f32 %v704, 0.5
  %v721 = vmul.f32 %v705, 0.5
  %v722 = vmul.f32 %v706, 0.5
  %v723 = vmul.f32 %v707, 0.5
  %v724 = vmul.f32 %v708, 0.5
  %v725 = vmul.f32 %v709, 0.5
  %v726 = vmul.f32 %v710, 0.5
  %v727 = vmul.f32 %v711, 0.5
  %v728 = vmul.f32 %v712, 0.5
  %v729 = vmul.f32 %v713, 0.5
  %v730 = vmul.f32 %v698, 0.70710677
  %v731 = vmul.f32 %v699, 0.70710677
  %v732 = vmul.f32 %v700, 0.70710677
  %v733 = vmul.f32 %v701, 0.70710677
  %v734 = vmul.f32 %v702, 0.70710677
  %v735 = vmul.f32 %v703, 0.70710677
  %v736 = vmul.f32 %v704, 0.70710677
  %v737 = vmul.f32 %v705, 0.70710677
  %v738 = vmul.f32 %v706, 0.70710677
  %v739 = vmul.f32 %v707, 0.70710677
  %v740 = vmul.f32 %v708, 0.70710677
  %v741 = vmul.f32 %v709, 0.70710677
  %v742 = vmul.f32 %v710, 0.70710677
  %v743 = vmul.f32 %v711, 0.70710677
  %v744 = vmul.f32 %v712, 0.70710677
  %v745 = vmul.f32 %v713, 0.70710677
  %vm746 = vcmp.ge.f32.partialorder %v730, 0.0
  %vm747 = vcmp.ge.f32.partialorder %v731, 0.0
  %vm748 = vcmp.ge.f32.partialorder %v732, 0.0
  %vm749 = vcmp.ge.f32.partialorder %v733, 0.0
  %vm750 = vcmp.ge.f32.partialorder %v734, 0.0
  %vm751 = vcmp.ge.f32.partialorder %v735, 0.0
  %vm752 = vcmp.ge.f32.partialorder %v736, 0.0
  %vm753 = vcmp.ge.f32.partialorder %v737, 0.0
  %vm754 = vcmp.ge.f32.partialorder %v738, 0.0
  %vm755 = vcmp.ge.f32.partialorder %v739, 0.0
  %vm756 = vcmp.ge.f32.partialorder %v740, 0.0
  %vm757 = vcmp.ge.f32.partialorder %v741, 0.0
  %vm758 = vcmp.ge.f32.partialorder %v742, 0.0
  %vm759 = vcmp.ge.f32.partialorder %v743, 0.0
  %vm760 = vcmp.ge.f32.partialorder %v744, 0.0
  %vm761 = vcmp.ge.f32.partialorder %v745, 0.0
  %v762 = vsel %vm746, 1.0, -1.0
  %v763 = vsel %vm747, 1.0, -1.0
  %v764 = vsel %vm748, 1.0, -1.0
  %v765 = vsel %vm749, 1.0, -1.0
  %v766 = vsel %vm750, 1.0, -1.0
  %v767 = vsel %vm751, 1.0, -1.0
  %v768 = vsel %vm752, 1.0, -1.0
  %v769 = vsel %vm753, 1.0, -1.0
  %v770 = vsel %vm754, 1.0, -1.0
  %v771 = vsel %vm755, 1.0, -1.0
  %v772 = vsel %vm756, 1.0, -1.0
  %v773 = vsel %vm757, 1.0, -1.0
  %v774 = vsel %vm758, 1.0, -1.0
  %v775 = vsel %vm759, 1.0, -1.0
  %v776 = vsel %vm760, 1.0, -1.0
  %v777 = vsel %vm761, 1.0, -1.0
  %v778 = vand.u32 2147483647, %v730
  %v779 = vand.u32 2147483647, %v731
  %v780 = vand.u32 2147483647, %v732
  %v781 = vand.u32 2147483647, %v733
  %v782 = vand.u32 2147483647, %v734
  %v783 = vand.u32 2147483647, %v735
  %v784 = vand.u32 2147483647, %v736
  %v785 = vand.u32 2147483647, %v737
  %v786 = vand.u32 2147483647, %v738
  %v787 = vand.u32 2147483647, %v739
  %v788 = vand.u32 2147483647, %v740
  %v789 = vand.u32 2147483647, %v741
  %v790 = vand.u32 2147483647, %v742
  %v791 = vand.u32 2147483647, %v743
  %v792 = vand.u32 2147483647, %v744
  %v793 = vand.u32 2147483647, %v745
  %v794 = vmul.f32 %v778, 0.3275911
  %v795 = vmul.f32 %v779, 0.3275911
  %v796 = vmul.f32 %v780, 0.3275911
  %v797 = vmul.f32 %v781, 0.3275911
  %v798 = vmul.f32 %v782, 0.3275911
  %v799 = vmul.f32 %v783, 0.3275911
  %v800 = vmul.f32 %v784, 0.3275911
  %v801 = vmul.f32 %v785, 0.3275911
  %v802 = vmul.f32 %v786, 0.3275911
  %v803 = vmul.f32 %v787, 0.3275911
  %v804 = vmul.f32 %v788, 0.3275911
  %v805 = vmul.f32 %v789, 0.3275911
  %v806 = vmul.f32 %v790, 0.3275911
  %v807 = vmul.f32 %v791, 0.3275911
  %v808 = vmul.f32 %v792, 0.3275911
  %v809 = vmul.f32 %v793, 0.3275911
  %v810 = vadd.f32 %v794, 1.0
  %v811 = vadd.f32 %v795, 1.0
  %v812 = vadd.f32 %v796, 1.0
  %v813 = vadd.f32 %v797, 1.0
  %v814 = vadd.f32 %v798, 1.0
  %v815 = vadd.f32 %v799, 1.0
  %v816 = vadd.f32 %v800, 1.0
  %v817 = vadd.f32 %v801, 1.0
  %v818 = vadd.f32 %v802, 1.0
  %v819 = vadd.f32 %v803, 1.0
  %v820 = vadd.f32 %v804, 1.0
  %v821 = vadd.f32 %v805, 1.0
  %v822 = vadd.f32 %v806, 1.0
  %v823 = vadd.f32 %v807, 1.0
  %v824 = vadd.f32 %v808, 1.0
  %v825 = vadd.f32 %v809, 1.0
  %v826 = vrcp.pop %v810
  %v827 = vmul.f32 1.0, %v826
  %v828 = vrcp.pop %v811
  %v829 = vmul.f32 1.0, %v828
  %v830 = vrcp.pop %v812
  %v831 = vmul.f32 1.0, %v830
  %v832 = vrcp.pop %v813
  %v833 = vmul.f32 1.0, %v832
  %v834 = vrcp.pop %v814
  %v835 = vmul.f32 1.0, %v834
  %v836 = vrcp.pop %v815
  %v837 = vmul.f32 1.0, %v836
  %v838 = vrcp.pop %v816
  %v839 = vmul.f32 1.0, %v838
  %v840 = vrcp.pop %v817
  %v841 = vmul.f32 1.0, %v840
  %v842 = vrcp.pop %v818
  %v843 = vmul.f32 1.0, %v842
  %v844 = vrcp.pop %v819
  %v845 = vmul.f32 1.0, %v844
  %v846 = vrcp.pop %v820
  %v847 = vmul.f32 1.0, %v846
  %v848 = vrcp.pop %v821
  %v849 = vmul.f32 1.0, %v848
  %v850 = vrcp.pop %v822
  %v851 = vmul.f32 1.0, %v850
  %v852 = vrcp.pop %v823
  %v853 = vmul.f32 1.0, %v852
  %v854 = vrcp.pop %v824
  %v855 = vmul.f32 1.0, %v854
  %v856 = vrcp.pop %v825
  %v857 = vmul.f32 1.0, %v856
  %v858 = vmul.f32 %v827, 1.0614054
  %v859 = vmul.f32 %v829, 1.0614054
  %v860 = vmul.f32 %v831, 1.0614054
  %v861 = vmul.f32 %v833, 1.0614054
  %v862 = vmul.f32 %v835, 1.0614054
  %v863 = vmul.f32 %v837, 1.0614054
  %v864 = vmul.f32 %v839, 1.0614054
  %v865 = vmul.f32 %v841, 1.0614054
  %v866 = vmul.f32 %v843, 1.0614054
  %v867 = vmul.f32 %v845, 1.0614054
  %v868 = vmul.f32 %v847, 1.0614054
  %v869 = vmul.f32 %v849, 1.0614054
  %v870 = vmul.f32 %v851, 1.0614054
  %v871 = vmul.f32 %v853, 1.0614054
  %v872 = vmul.f32 %v855, 1.0614054
  %v873 = vmul.f32 %v857, 1.0614054
  %v874 = vadd.f32 %v858, -1.4531521
  %v875 = vadd.f32 %v859, -1.4531521
  %v876 = vadd.f32 %v860, -1.4531521
  %v877 = vadd.f32 %v861, -1.4531521
  %v878 = vadd.f32 %v862, -1.4531521
  %v879 = vadd.f32 %v863, -1.4531521
  %v880 = vadd.f32 %v864, -1.4531521
  %v881 = vadd.f32 %v865, -1.4531521
  %v882 = vadd.f32 %v866, -1.4531521
  %v883 = vadd.f32 %v867, -1.4531521
  %v884 = vadd.f32 %v868, -1.4531521
  %v885 = vadd.f32 %v869, -1.4531521
  %v886 = vadd.f32 %v870, -1.4531521
  %v887 = vadd.f32 %v871, -1.4531521
  %v888 = vadd.f32 %v872, -1.4531521
  %v889 = vadd.f32 %v873, -1.4531521
  %v890 = vmul.f32 %v874, %v827
  %v891 = vmul.f32 %v875, %v829
  %v892 = vmul.f32 %v876, %v831
  %v893 = vmul.f32 %v877, %v833
  %v894 = vmul.f32 %v878, %v835
  %v895 = vmul.f32 %v879, %v837
  %v896 = vmul.f32 %v880, %v839
  %v897 = vmul.f32 %v881, %v841
  %v898 = vmul.f32 %v882, %v843
  %v899 = vmul.f32 %v883, %v845
  %v900 = vmul.f32 %v884, %v847
  %v901 = vmul.f32 %v885, %v849
  %v902 = vmul.f32 %v886, %v851
  %v903 = vmul.f32 %v887, %v853
  %v904 = vmul.f32 %v888, %v855
  %v905 = vmul.f32 %v889, %v857
  %v906 = vadd.f32 %v890, 1.4214138
  %v907 = vadd.f32 %v891, 1.4214138
  %v908 = vadd.f32 %v892, 1.4214138
  %v909 = vadd.f32 %v893, 1.4214138
  %v910 = vadd.f32 %v894, 1.4214138
  %v911 = vadd.f32 %v895, 1.4214138
  %v912 = vadd.f32 %v896, 1.4214138
  %v913 = vadd.f32 %v897, 1.4214138
  %v914 = vadd.f32 %v898, 1.4214138
  %v915 = vadd.f32 %v899, 1.4214138
  %v916 = vadd.f32 %v900, 1.4214138
  %v917 = vadd.f32 %v901, 1.4214138
  %v918 = vadd.f32 %v902, 1.4214138
  %v919 = vadd.f32 %v903, 1.4214138
  %v920 = vadd.f32 %v904, 1.4214138
  %v921 = vadd.f32 %v905, 1.4214138
  %v922 = vmul.f32 %v906, %v827
  %v923 = vmul.f32 %v907, %v829
  %v924 = vmul.f32 %v908, %v831
  %v925 = vmul.f32 %v909, %v833
  %v926 = vmul.f32 %v910, %v835
  %v927 = vmul.f32 %v911, %v837
  %v928 = vmul.f32 %v912, %v839
  %v929 = vmul.f32 %v913, %v841
  %v930 = vmul.f32 %v914, %v843
  %v931 = vmul.f32 %v915, %v845
  %v932 = vmul.f32 %v916, %v847
  %v933 = vmul.f32 %v917, %v849
  %v934 = vmul.f32 %v918, %v851
  %v935 = vmul.f32 %v919, %v853
  %v936 = vmul.f32 %v920, %v855
  %v937 = vmul.f32 %v921, %v857
  %v938 = vadd.f32 %v922, -0.28449672
  %v939 = vadd.f32 %v923, -0.28449672
  %v940 = vadd.f32 %v924, -0.28449672
  %v941 = vadd.f32 %v925, -0.28449672
  %v942 = vadd.f32 %v926, -0.28449672
  %v943 = vadd.f32 %v927, -0.28449672
  %v944 = vadd.f32 %v928, -0.28449672
  %v945 = vadd.f32 %v929, -0.28449672
  %v946 = vadd.f32 %v930, -0.28449672
  %v947 = vadd.f32 %v931, -0.28449672
  %v948 = vadd.f32 %v932, -0.28449672
  %v949 = vadd.f32 %v933, -0.28449672
  %v950 = vadd.f32 %v934, -0.28449672
  %v951 = vadd.f32 %v935, -0.28449672
  %v952 = vadd.f32 %v936, -0.28449672
  %v953 = vadd.f32 %v937, -0.28449672
  %v954 = vmul.f32 %v938, %v827
  %v955 = vmul.f32 %v939, %v829
  %v956 = vmul.f32 %v940, %v831
  %v957 = vmul.f32 %v941, %v833
  %v958 = vmul.f32 %v942, %v835
  %v959 = vmul.f32 %v943, %v837
  %v960 = vmul.f32 %v944, %v839
  %v961 = vmul.f32 %v945, %v841
  %v962 = vmul.f32 %v946, %v843
  %v963 = vmul.f32 %v947, %v845
  %v964 = vmul.f32 %v948, %v847
  %v965 = vmul.f32 %v949, %v849
  %v966 = vmul.f32 %v950, %v851
  %v967 = vmul.f32 %v951, %v853
  %v968 = vmul.f32 %v952, %v855
  %v969 = vmul.f32 %v953, %v857
  %v970 = vadd.f32 %v954, 0.2548296
  %v971 = vadd.f32 %v955, 0.2548296
  %v972 = vadd.f32 %v956, 0.2548296
  %v973 = vadd.f32 %v957, 0.2548296
  %v974 = vadd.f32 %v958, 0.2548296
  %v975 = vadd.f32 %v959, 0.2548296
  %v976 = vadd.f32 %v960, 0.2548296
  %v977 = vadd.f32 %v961, 0.2548296
  %v978 = vadd.f32 %v962, 0.2548296
  %v979 = vadd.f32 %v963, 0.2548296
  %v980 = vadd.f32 %v964, 0.2548296
  %v981 = vadd.f32 %v965, 0.2548296
  %v982 = vadd.f32 %v966, 0.2548296
  %v983 = vadd.f32 %v967, 0.2548296
  %v984 = vadd.f32 %v968, 0.2548296
  %v985 = vadd.f32 %v969, 0.2548296
  %v986 = vmul.f32 %v970, %v827
  %v987 = vmul.f32 %v971, %v829
  %v988 = vmul.f32 %v972, %v831
  %v989 = vmul.f32 %v973, %v833
  %v990 = vmul.f32 %v974, %v835
  %v991 = vmul.f32 %v975, %v837
  %v992 = vmul.f32 %v976, %v839
  %v993 = vmul.f32 %v977, %v841
  %v994 = vmul.f32 %v978, %v843
  %v995 = vmul.f32 %v979, %v845
  %v996 = vmul.f32 %v980, %v847
  %v997 = vmul.f32 %v981, %v849
  %v998 = vmul.f32 %v982, %v851
  %v999 = vmul.f32 %v983, %v853
  %v1000 = vmul.f32 %v984, %v855
  %v1001 = vmul.f32 %v985, %v857
  %v1002 = vsub.f32 0.0, %v778
  %v1003 = vsub.f32 0.0, %v779
  %v1004 = vsub.f32 0.0, %v780
  %v1005 = vsub.f32 0.0, %v781
  %v1006 = vsub.f32 0.0, %v782
  %v1007 = vsub.f32 0.0, %v783
  %v1008 = vsub.f32 0.0, %v784
  %v1009 = vsub.f32 0.0, %v785
  %v1010 = vsub.f32 0.0, %v786
  %v1011 = vsub.f32 0.0, %v787
  %v1012 = vsub.f32 0.0, %v788
  %v1013 = vsub.f32 0.0, %v789
  %v1014 = vsub.f32 0.0, %v790
  %v1015 = vsub.f32 0.0, %v791
  %v1016 = vsub.f32 0.0, %v792
  %v1017 = vsub.f32 0.0, %v793
  %v1018 = vmul.f32 %v1002, %v778
  %v1019 = vmul.f32 %v1003, %v779
  %v1020 = vmul.f32 %v1004, %v780
  %v1021 = vmul.f32 %v1005, %v781
  %v1022 = vmul.f32 %v1006, %v782
  %v1023 = vmul.f32 %v1007, %v783
  %v1024 = vmul.f32 %v1008, %v784
  %v1025 = vmul.f32 %v1009, %v785
  %v1026 = vmul.f32 %v1010, %v786
  %v1027 = vmul.f32 %v1011, %v787
  %v1028 = vmul.f32 %v1012, %v788
  %v1029 = vmul.f32 %v1013, %v789
  %v1030 = vmul.f32 %v1014, %v790
  %v1031 = vmul.f32 %v1015, %v791
  %v1032 = vmul.f32 %v1016, %v792
  %v1033 = vmul.f32 %v1017, %v793
  %v1034 = vmul.f32 %v1018, 1.442695
  %v1035 = vpow.pop %v1034
  %v1036 = vmul.f32 %v1019, 1.442695
  %v1037 = vpow.pop %v1036
  %v1038 = vmul.f32 %v1020, 1.442695
  %v1039 = vpow.pop %v1038
  %v1040 = vmul.f32 %v1021, 1.442695
  %v1041 = vpow.pop %v1040
  %v1042 = vmul.f32 %v1022, 1.442695
  %v1043 = vpow.pop %v1042
  %v1044 = vmul.f32 %v1023, 1.442695
  %v1045 = vpow.pop %v1044
  %v1046 = vmul.f32 %v1024, 1.442695
  %v1047 = vpow.pop %v1046
  %v1048 = vmul.f32 %v1025, 1.442695
  %v1049 = vpow.pop %v1048
  %v1050 = vmul.f32 %v1026, 1.442695
  %v1051 = vpow.pop %v1050
  %v1052 = vmul.f32 %v1027, 1.442695
  %v1053 = vpow.pop %v1052
  %v1054 = vmul.f32 %v1028, 1.442695
  %v1055 = vpow.pop %v1054
  %v1056 = vmul.f32 %v1029, 1.442695
  %v1057 = vpow.pop %v1056
  %v1058 = vmul.f32 %v1030, 1.442695
  %v1059 = vpow.pop %v1058
  %v1060 = vmul.f32 %v1031, 1.442695
  %v1061 = vpow.pop %v1060
  %v1062 = vmul.f32 %v1032, 1.442695
  %v1063 = vpow.pop %v1062
  %v1064 = vmul.f32 %v1033, 1.442695
  %v1065 = vpow.pop %v1064
  %v1066 = vmul.f32 %v986, %v1035
  %v1067 = vmul.f32 %v987, %v1037
  %v1068 = vmul.f32 %v988, %v1039
  %v1069 = vmul.f32 %v989, %v1041
  %v1070 = vmul.f32 %v990, %v1043
  %v1071 = vmul.f32 %v991, %v1045
  %v1072 = vmul.f32 %v992, %v1047
  %v1073 = vmul.f32 %v993, %v1049
  %v1074 = vmul.f32 %v994, %v1051
  %v1075 = vmul.f32 %v995, %v1053
  %v1076 = vmul.f32 %v996, %v1055
  %v1077 = vmul.f32 %v997, %v1057
  %v1078 = vmul.f32 %v998, %v1059
  %v1079 = vmul.f32 %v999, %v1061
  %v1080 = vmul.f32 %v1000, %v1063
  %v1081 = vmul.f32 %v1001, %v1065
  %v1082 = vsub.f32 1.0, %v1066
  %v1083 = vsub.f32 1.0, %v1067
  %v1084 = vsub.f32 1.0, %v1068
  %v1085 = vsub.f32 1.0, %v1069
  %v1086 = vsub.f32 1.0, %v1070
  %v1087 = vsub.f32 1.0, %v1071
  %v1088 = vsub.f32 1.0, %v1072
  %v1089 = vsub.f32 1.0, %v1073
  %v1090 = vsub.f32 1.0, %v1074
  %v1091 = vsub.f32 1.0, %v1075
  %v1092 = vsub.f32 1.0, %v1076
  %v1093 = vsub.f32 1.0, %v1077
  %v1094 = vsub.f32 1.0, %v1078
  %v1095 = vsub.f32 1.0, %v1079
  %v1096 = vsub.f32 1.0, %v1080
  %v1097 = vsub.f32 1.0, %v1081
  %v1098 = vmul.f32 %v762, %v1082
  %v1099 = vmul.f32 %v763, %v1083
  %v1100 = vmul.f32 %v764, %v1084
  %v1101 = vmul.f32 %v765, %v1085
  %v1102 = vmul.f32 %v766, %v1086
  %v1103 = vmul.f32 %v767, %v1087
  %v1104 = vmul.f32 %v768, %v1088
  %v1105 = vmul.f32 %v769, %v1089
  %v1106 = vmul.f32 %v770, %v1090
  %v1107 = vmul.f32 %v771, %v1091
  %v1108 = vmul.f32 %v772, %v1092
  %v1109 = vmul.f32 %v773, %v1093
  %v1110 = vmul.f32 %v774, %v1094
  %v1111 = vmul.f32 %v775, %v1095
  %v1112 = vmul.f32 %v776, %v1096
  %v1113 = vmul.f32 %v777, %v1097
  %v1114 = vadd.f32 %v1098, 1.0
  %v1115 = vadd.f32 %v1099, 1.0
  %v1116 = vadd.f32 %v1100, 1.0
  %v1117 = vadd.f32 %v1101, 1.0
  %v1118 = vadd.f32 %v1102, 1.0
  %v1119 = vadd.f32 %v1103, 1.0
  %v1120 = vadd.f32 %v1104, 1.0
  %v1121 = vadd.f32 %v1105, 1.0
  %v1122 = vadd.f32 %v1106, 1.0
  %v1123 = vadd.f32 %v1107, 1.0
  %v1124 = vadd.f32 %v1108, 1.0
  %v1125 = vadd.f32 %v1109, 1.0
  %v1126 = vadd.f32 %v1110, 1.0
  %v1127 = vadd.f32 %v1111, 1.0
  %v1128 = vadd.f32 %v1112, 1.0
  %v1129 = vadd.f32 %v1113, 1.0
  %v1130 = vmul.f32 %v714, %v1114
  %v1131 = vmul.f32 %v715, %v1115
  %v1132 = vmul.f32 %v716, %v1116
  %v1133 = vmul.f32 %v717, %v1117
  %v1134 = vmul.f32 %v718, %v1118
  %v1135 = vmul.f32 %v719, %v1119
  %v1136 = vmul.f32 %v720, %v1120
  %v1137 = vmul.f32 %v721, %v1121
  %v1138 = vmul.f32 %v722, %v1122
  %v1139 = vmul.f32 %v723, %v1123
  %v1140 = vmul.f32 %v724, %v1124
  %v1141 = vmul.f32 %v725, %v1125
  %v1142 = vmul.f32 %v726, %v1126
  %v1143 = vmul.f32 %v727, %v1127
  %v1144 = vmul.f32 %v728, %v1128
  %v1145 = vmul.f32 %v729, %v1129
  %v1146 = vld [vmem:[%s6] sm:$0xff]
  %v1147 = vld [vmem:[%s6 + $0x8] sm:$0xff]
  %v1148 = vld [vmem:[%s6 + $0x10] sm:$0xff]
  %v1149 = vld [vmem:[%s6 + $0x18] sm:$0xff]
  %v1150 = vld [vmem:[%s6 + $0x20] sm:$0xff]
  %v1151 = vld [vmem:[%s6 + $0x28] sm:$0xff]
  %v1152 = vld [vmem:[%s6 + $0x30] sm:$0xff]
  %v1153 = vld [vmem:[%s6 + $0x38] sm:$0xff]
  %v1154 = vld [vmem:[%s6 + $0x40] sm:$0xff]
  %v1155 = vld [vmem:[%s6 + $0x48] sm:$0xff]
  %v1156 = vld [vmem:[%s6 + $0x50] sm:$0xff]
  %v1157 = vld [vmem:[%s6 + $0x58] sm:$0xff]
  %v1158 = vld [vmem:[%s6 + $0x60] sm:$0xff]
  %v1159 = vld [vmem:[%s6 + $0x68] sm:$0xff]
  %v1160 = vld [vmem:[%s6 + $0x70] sm:$0xff]
  %v1161 = vld [vmem:[%s6 + $0x78] sm:$0xff]
  %v1162 = vld [vmem:[%s6 + $0x80] sm:$0xff]
  %v1163 = vld [vmem:[%s6 + $0x88] sm:$0xff]
  %v1164 = vld [vmem:[%s6 + $0x90] sm:$0xff]
  %v1165 = vld [vmem:[%s6 + $0x98] sm:$0xff]
  %v1166 = vld [vmem:[%s6 + $0xa0] sm:$0xff]
  %v1167 = vld [vmem:[%s6 + $0xa8] sm:$0xff]
  %v1168 = vld [vmem:[%s6 + $0xb0] sm:$0xff]
  %v1169 = vld [vmem:[%s6 + $0xb8] sm:$0xff]
  %v1170 = vld [vmem:[%s6 + $0xc0] sm:$0xff]
  %v1171 = vld [vmem:[%s6 + $0xc8] sm:$0xff]
  %v1172 = vld [vmem:[%s6 + $0xd0] sm:$0xff]
  %v1173 = vld [vmem:[%s6 + $0xd8] sm:$0xff]
  %v1174 = vld [vmem:[%s6 + $0xe0] sm:$0xff]
  %v1175 = vld [vmem:[%s6 + $0xe8] sm:$0xff]
  %v1176 = vld [vmem:[%s6 + $0xf0] sm:$0xff]
  %v1177 = vld [vmem:[%s6 + $0xf8] sm:$0xff]
  %v1178 = vld [vmem:[%s6 + $0x100] sm:$0xff]
  %v1179 = vld [vmem:[%s6 + $0x108] sm:$0xff]
  %v1180 = vld [vmem:[%s6 + $0x110] sm:$0xff]
  %v1181 = vld [vmem:[%s6 + $0x118] sm:$0xff]
  %v1182 = vld [vmem:[%s6 + $0x120] sm:$0xff]
  %v1183 = vld [vmem:[%s6 + $0x128] sm:$0xff]
  %v1184 = vld [vmem:[%s6 + $0x130] sm:$0xff]
  %v1185 = vld [vmem:[%s6 + $0x138] sm:$0xff]
  %v1186 = vld [vmem:[%s6 + $0x140] sm:$0xff]
  %v1187 = vld [vmem:[%s6 + $0x148] sm:$0xff]
  %v1188 = vld [vmem:[%s6 + $0x150] sm:$0xff]
  %v1189 = vld [vmem:[%s6 + $0x158] sm:$0xff]
  %v1190 = vld [vmem:[%s6 + $0x160] sm:$0xff]
  %v1191 = vld [vmem:[%s6 + $0x168] sm:$0xff]
  %v1192 = vld [vmem:[%s6 + $0x170] sm:$0xff]
  %v1193 = vld [vmem:[%s6 + $0x178] sm:$0xff]
  %v1194 = vld [vmem:[%s6 + $0x180] sm:$0xff]
  %v1195 = vld [vmem:[%s6 + $0x188] sm:$0xff]
  %v1196 = vld [vmem:[%s6 + $0x190] sm:$0xff]
  %v1197 = vld [vmem:[%s6 + $0x198] sm:$0xff]
  %v1198 = vld [vmem:[%s6 + $0x1a0] sm:$0xff]
  %v1199 = vld [vmem:[%s6 + $0x1a8] sm:$0xff]
  %v1200 = vld [vmem:[%s6 + $0x1b0] sm:$0xff]
  %v1201 = vld [vmem:[%s6 + $0x1b8] sm:$0xff]
  %v1202 = vld [vmem:[%s6 + $0x1c0] sm:$0xff]
  %v1203 = vld [vmem:[%s6 + $0x1c8] sm:$0xff]
  %v1204 = vld [vmem:[%s6 + $0x1d0] sm:$0xff]
  %v1205 = vld [vmem:[%s6 + $0x1d8] sm:$0xff]
  %v1206 = vld [vmem:[%s6 + $0x1e0] sm:$0xff]
  %v1207 = vld [vmem:[%s6 + $0x1e8] sm:$0xff]
  %v1208 = vld [vmem:[%s6 + $0x1f0] sm:$0xff]
  %v1209 = vld [vmem:[%s6 + $0x1f8] sm:$0xff]
  %v1210 = vld [vmem:[%s7] sm:$0xf]
  %v1212 = vlaneseq
  %v1213 = vshrl.u32 %v1212, 7
  %v1214 = vsub.s32 0, %v1213
  %v1215 = vrot.slane %v1210, %v1214
  %v1216 = vlaneseq
  %v1217 = vshrl.u32 %v1216, 7
  %v1218 = vsub.s32 1, %v1217
  %v1219 = vrot.slane %v1210, %v1218
  %v1220 = vlaneseq
  %v1221 = vshrl.u32 %v1220, 7
  %v1222 = vsub.s32 2, %v1221
  %v1223 = vrot.slane %v1210, %v1222
  %v1224 = vlaneseq
  %v1225 = vshrl.u32 %v1224, 7
  %v1226 = vsub.s32 3, %v1225
  %v1227 = vrot.slane %v1210, %v1226
  %1232 = vmatprep.subr.mxu0 %v1207
  %1233 = vmatpush1.msra.mxu0 %v1206
  %1234 = vmatprep.subr.mxu0 %v1203
  %1235 = vmatpush1.msra.mxu0 %v1202
  %1236 = vmatprep.subr.mxu0 %v1199
  %1237 = vmatpush1.msra.mxu0 %v1198
  %1238 = vmatprep.subr.mxu0 %v1195
  %1239 = vmatpush1.msra.mxu0 %v1194
  %1240 = vmatprep.subr.mxu0 %v1191
  %1241 = vmatpush1.msra.mxu0 %v1190
  %1242 = vmatprep.subr.mxu0 %v1187
  %1243 = vmatpush1.msra.mxu0 %v1186
  %1244 = vmatprep.subr.mxu0 %v1183
  %1245 = vmatpush1.msra.mxu0 %v1182
  %1246 = vmatprep.subr.mxu0 %v1179
  %1247 = vmatpush1.msra.mxu0 %v1178
  %1248 = vmatprep.subr.mxu0 %v1175
  %1249 = vmatpush1.msra.mxu0 %v1174
  %1250 = vmatprep.subr.mxu0 %v1171
  %1251 = vmatpush1.msra.mxu0 %v1170
  %1252 = vmatprep.subr.mxu0 %v1167
  %1253 = vmatpush1.msra.mxu0 %v1166
  %1254 = vmatprep.subr.mxu0 %v1163
  %1255 = vmatpush1.msra.mxu0 %v1162
  %1256 = vmatprep.subr.mxu0 %v1159
  %1257 = vmatpush1.msra.mxu0 %v1158
  %1258 = vmatprep.subr.mxu0 %v1155
  %1259 = vmatpush1.msra.mxu0 %v1154
  %1260 = vmatprep.subr.mxu0 %v1151
  %1261 = vmatpush1.msra.mxu0 %v1150
  %1262 = vmatprep.subr.mxu0 %v1147
  %1263 = vmatpush1.msra.mxu0 %v1146
  %1264 = vmatprep.subr.mxu0 0.0
  %1265 = vmatpush2.msra.mxu0 0.0
  %1266 = vmatprep.subr.mxu0 0.0
  %1267 = vmatpush2.msra.mxu0 0.0
  %1268 = vmatprep.subr.mxu0 0.0
  %1269 = vmatpush2.msra.mxu0 0.0
  %1270 = vmatprep.subr.mxu0 0.0
  %1271 = vmatpush2.msra.mxu0 0.0
  %1272 = vmatprep.subr.mxu0 0.0
  %1273 = vmatpush2.msra.mxu0 0.0
  %1274 = vmatprep.subr.mxu0 0.0
  %1275 = vmatpush2.msra.mxu0 0.0
  %1276 = vmatprep.subr.mxu0 0.0
  %1277 = vmatpush2.msra.mxu0 0.0
  %1278 = vmatprep.subr.mxu0 0.0
  %1279 = vmatpush2.msra.mxu0 0.0
  %1280 = vmatprep.subr.mxu0 0.0
  %1281 = vmatpush2.msra.mxu0 0.0
  %1282 = vmatprep.subr.mxu0 0.0
  %1283 = vmatpush2.msra.mxu0 0.0
  %1284 = vmatprep.subr.mxu0 0.0
  %1285 = vmatpush2.msra.mxu0 0.0
  %1286 = vmatprep.subr.mxu0 0.0
  %1287 = vmatpush2.msra.mxu0 0.0
  %1288 = vmatprep.subr.mxu0 0.0
  %1289 = vmatpush2.msra.mxu0 0.0
  %1290 = vmatprep.subr.mxu0 0.0
  %1291 = vmatpush2.msra.mxu0 0.0
  %1292 = vmatprep.subr.mxu0 0.0
  %1293 = vmatpush2.msra.mxu0 0.0
  %1294 = vmatprep.subr.mxu0 0.0
  %1295 = vmatpush2.msra.mxu0 0.0
  %1296 = vmatprep.mubr.f32.mxu0 0.0
  %1297 = vmatmul.mubr.f32.gmra.mxu0 %v1130
  %v1298 = vpop.f32.mrf.mxu0
  %v1299 = vadd.f32 %v1215, %v1298
  %v1300 = vpop.f32.mrf.mxu0
  %v1301 = vadd.f32 %v1219, %v1300
  %1302 = vmatprep.mubr.f32.mxu0 0.0
  %1303 = vmatmul.mubr.f32.gmra.mxu0 %v1131
  %v1304 = vpop.f32.mrf.mxu0
  %v1305 = vadd.f32 %v1215, %v1304
  %v1306 = vpop.f32.mrf.mxu0
  %v1307 = vadd.f32 %v1219, %v1306
  %1308 = vmatprep.mubr.f32.mxu0 0.0
  %1309 = vmatmul.mubr.f32.gmra.mxu0 %v1132
  %v1310 = vpop.f32.mrf.mxu0
  %v1311 = vadd.f32 %v1215, %v1310
  %v1312 = vpop.f32.mrf.mxu0
  %v1313 = vadd.f32 %v1219, %v1312
  %1314 = vmatprep.mubr.f32.mxu0 0.0
  %1315 = vmatmul.mubr.f32.gmra.mxu0 %v1133
  %v1316 = vpop.f32.mrf.mxu0
  %v1317 = vadd.f32 %v1215, %v1316
  %v1318 = vpop.f32.mrf.mxu0
  %v1319 = vadd.f32 %v1219, %v1318
  %1320 = vmatprep.mubr.f32.mxu0 0.0
  %1321 = vmatmul.mubr.f32.gmra.mxu0 %v1134
  %v1322 = vpop.f32.mrf.mxu0
  %v1323 = vadd.f32 %v1215, %v1322
  %v1324 = vpop.f32.mrf.mxu0
  %v1325 = vadd.f32 %v1219, %v1324
  %1326 = vmatprep.mubr.f32.mxu0 0.0
  %1327 = vmatmul.mubr.f32.gmra.mxu0 %v1135
  %v1328 = vpop.f32.mrf.mxu0
  %v1329 = vadd.f32 %v1215, %v1328
  %v1330 = vpop.f32.mrf.mxu0
  %v1331 = vadd.f32 %v1219, %v1330
  %1332 = vmatprep.mubr.f32.mxu0 0.0
  %1333 = vmatmul.mubr.f32.gmra.mxu0 %v1136
  %v1334 = vpop.f32.mrf.mxu0
  %v1335 = vadd.f32 %v1215, %v1334
  %v1336 = vpop.f32.mrf.mxu0
  %v1337 = vadd.f32 %v1219, %v1336
  %1338 = vmatprep.mubr.f32.mxu0 0.0
  %1339 = vmatmul.mubr.f32.gmra.mxu0 %v1137
  %v1340 = vpop.f32.mrf.mxu0
  %v1341 = vadd.f32 %v1215, %v1340
  %v1342 = vpop.f32.mrf.mxu0
  %v1343 = vadd.f32 %v1219, %v1342
  %1344 = vmatprep.mubr.f32.mxu0 0.0
  %1345 = vmatmul.mubr.f32.gmra.mxu0 %v1138
  %v1346 = vpop.f32.mrf.mxu0
  %v1347 = vadd.f32 %v1215, %v1346
  %v1348 = vpop.f32.mrf.mxu0
  %v1349 = vadd.f32 %v1219, %v1348
  %1350 = vmatprep.mubr.f32.mxu0 0.0
  %1351 = vmatmul.mubr.f32.gmra.mxu0 %v1139
  %v1352 = vpop.f32.mrf.mxu0
  %v1353 = vadd.f32 %v1215, %v1352
  %v1354 = vpop.f32.mrf.mxu0
  %v1355 = vadd.f32 %v1219, %v1354
  %1356 = vmatprep.mubr.f32.mxu0 0.0
  %1357 = vmatmul.mubr.f32.gmra.mxu0 %v1140
  %v1358 = vpop.f32.mrf.mxu0
  %v1359 = vadd.f32 %v1215, %v1358
  %v1360 = vpop.f32.mrf.mxu0
  %v1361 = vadd.f32 %v1219, %v1360
  %1362 = vmatprep.mubr.f32.mxu0 0.0
  %1363 = vmatmul.mubr.f32.gmra.mxu0 %v1141
  %v1364 = vpop.f32.mrf.mxu0
  %v1365 = vadd.f32 %v1215, %v1364
  %v1366 = vpop.f32.mrf.mxu0
  %v1367 = vadd.f32 %v1219, %v1366
  %1368 = vmatprep.mubr.f32.mxu0 0.0
  %1369 = vmatmul.mubr.f32.gmra.mxu0 %v1142
  %v1370 = vpop.f32.mrf.mxu0
  %v1371 = vadd.f32 %v1215, %v1370
  %v1372 = vpop.f32.mrf.mxu0
  %v1373 = vadd.f32 %v1219, %v1372
  %1374 = vmatprep.mubr.f32.mxu0 0.0
  %1375 = vmatmul.mubr.f32.gmra.mxu0 %v1143
  %v1376 = vpop.f32.mrf.mxu0
  %v1377 = vadd.f32 %v1215, %v1376
  %v1378 = vpop.f32.mrf.mxu0
  %v1379 = vadd.f32 %v1219, %v1378
  %1380 = vmatprep.mubr.f32.mxu0 0.0
  %1381 = vmatmul.mubr.f32.gmra.mxu0 %v1144
  %v1382 = vpop.f32.mrf.mxu0
  %v1383 = vadd.f32 %v1215, %v1382
  %v1384 = vpop.f32.mrf.mxu0
  %v1385 = vadd.f32 %v1219, %v1384
  %1386 = vmatprep.mubr.f32.mxu0 0.0
  %1387 = vmatmul.mubr.f32.gmra.mxu0 %v1145
  %v1388 = vpop.f32.mrf.mxu0
  %v1389 = vadd.f32 %v1215, %v1388
  %v1390 = vpop.f32.mrf.mxu0
  %v1391 = vadd.f32 %v1219, %v1390
  %1392 = vdwg.mxu0
  %1393 = vmatprep.subr.mxu0 %v1209
  %1394 = vmatpush1.msra.mxu0 %v1208
  %1395 = vmatprep.subr.mxu0 %v1205
  %1396 = vmatpush1.msra.mxu0 %v1204
  %1397 = vmatprep.subr.mxu0 %v1201
  %1398 = vmatpush1.msra.mxu0 %v1200
  %1399 = vmatprep.subr.mxu0 %v1197
  %1400 = vmatpush1.msra.mxu0 %v1196
  %1401 = vmatprep.subr.mxu0 %v1193
  %1402 = vmatpush1.msra.mxu0 %v1192
  %1403 = vmatprep.subr.mxu0 %v1189
  %1404 = vmatpush1.msra.mxu0 %v1188
  %1405 = vmatprep.subr.mxu0 %v1185
  %1406 = vmatpush1.msra.mxu0 %v1184
  %1407 = vmatprep.subr.mxu0 %v1181
  %1408 = vmatpush1.msra.mxu0 %v1180
  %1409 = vmatprep.subr.mxu0 %v1177
  %1410 = vmatpush1.msra.mxu0 %v1176
  %1411 = vmatprep.subr.mxu0 %v1173
  %1412 = vmatpush1.msra.mxu0 %v1172
  %1413 = vmatprep.subr.mxu0 %v1169
  %1414 = vmatpush1.msra.mxu0 %v1168
  %1415 = vmatprep.subr.mxu0 %v1165
  %1416 = vmatpush1.msra.mxu0 %v1164
  %1417 = vmatprep.subr.mxu0 %v1161
  %1418 = vmatpush1.msra.mxu0 %v1160
  %1419 = vmatprep.subr.mxu0 %v1157
  %1420 = vmatpush1.msra.mxu0 %v1156
  %1421 = vmatprep.subr.mxu0 %v1153
  %1422 = vmatpush1.msra.mxu0 %v1152
  %1423 = vmatprep.subr.mxu0 %v1149
  %1424 = vmatpush1.msra.mxu0 %v1148
  %1425 = vmatprep.subr.mxu0 0.0
  %1426 = vmatpush2.msra.mxu0 0.0
  %1427 = vmatprep.subr.mxu0 0.0
  %1428 = vmatpush2.msra.mxu0 0.0
  %1429 = vmatprep.subr.mxu0 0.0
  %1430 = vmatpush2.msra.mxu0 0.0
  %1431 = vmatprep.subr.mxu0 0.0
  %1432 = vmatpush2.msra.mxu0 0.0
  %1433 = vmatprep.subr.mxu0 0.0
  %1434 = vmatpush2.msra.mxu0 0.0
  %1435 = vmatprep.subr.mxu0 0.0
  %1436 = vmatpush2.msra.mxu0 0.0
  %1437 = vmatprep.subr.mxu0 0.0
  %1438 = vmatpush2.msra.mxu0 0.0
  %1439 = vmatprep.subr.mxu0 0.0
  %1440 = vmatpush2.msra.mxu0 0.0
  %1441 = vmatprep.subr.mxu0 0.0
  %1442 = vmatpush2.msra.mxu0 0.0
  %1443 = vmatprep.subr.mxu0 0.0
  %1444 = vmatpush2.msra.mxu0 0.0
  %1445 = vmatprep.subr.mxu0 0.0
  %1446 = vmatpush2.msra.mxu0 0.0
  %1447 = vmatprep.subr.mxu0 0.0
  %1448 = vmatpush2.msra.mxu0 0.0
  %1449 = vmatprep.subr.mxu0 0.0
  %1450 = vmatpush2.msra.mxu0 0.0
  %1451 = vmatprep.subr.mxu0 0.0
  %1452 = vmatpush2.msra.mxu0 0.0
  %1453 = vmatprep.subr.mxu0 0.0
  %1454 = vmatpush2.msra.mxu0 0.0
  %1455 = vmatprep.subr.mxu0 0.0
  %1456 = vmatpush2.msra.mxu0 0.0
  %1457 = vmatprep.mubr.f32.mxu0 0.0
  %1458 = vmatmul.mubr.f32.gmra.mxu0 %v1130
  %v1459 = vpop.f32.mrf.mxu0
  %v1460 = vadd.f32 %v1223, %v1459
  %v1461 = vpop.f32.mrf.mxu0
  %v1462 = vadd.f32 %v1227, %v1461
  %1463 = vmatprep.mubr.f32.mxu0 0.0
  %1464 = vmatmul.mubr.f32.gmra.mxu0 %v1131
  %v1465 = vpop.f32.mrf.mxu0
  %v1466 = vadd.f32 %v1223, %v1465
  %v1467 = vpop.f32.mrf.mxu0
  %v1468 = vadd.f32 %v1227, %v1467
  %1469 = vmatprep.mubr.f32.mxu0 0.0
  %1470 = vmatmul.mubr.f32.gmra.mxu0 %v1132
  %v1471 = vpop.f32.mrf.mxu0
  %v1472 = vadd.f32 %v1223, %v1471
  %v1473 = vpop.f32.mrf.mxu0
  %v1474 = vadd.f32 %v1227, %v1473
  %1475 = vmatprep.mubr.f32.mxu0 0.0
  %1476 = vmatmul.mubr.f32.gmra.mxu0 %v1133
  %v1477 = vpop.f32.mrf.mxu0
  %v1478 = vadd.f32 %v1223, %v1477
  %v1479 = vpop.f32.mrf.mxu0
  %v1480 = vadd.f32 %v1227, %v1479
  %1481 = vmatprep.mubr.f32.mxu0 0.0
  %1482 = vmatmul.mubr.f32.gmra.mxu0 %v1134
  %v1483 = vpop.f32.mrf.mxu0
  %v1484 = vadd.f32 %v1223, %v1483
  %v1485 = vpop.f32.mrf.mxu0
  %v1486 = vadd.f32 %v1227, %v1485
  %1487 = vmatprep.mubr.f32.mxu0 0.0
  %1488 = vmatmul.mubr.f32.gmra.mxu0 %v1135
  %v1489 = vpop.f32.mrf.mxu0
  %v1490 = vadd.f32 %v1223, %v1489
  %v1491 = vpop.f32.mrf.mxu0
  %v1492 = vadd.f32 %v1227, %v1491
  %1493 = vmatprep.mubr.f32.mxu0 0.0
  %1494 = vmatmul.mubr.f32.gmra.mxu0 %v1136
  %v1495 = vpop.f32.mrf.mxu0
  %v1496 = vadd.f32 %v1223, %v1495
  %v1497 = vpop.f32.mrf.mxu0
  %v1498 = vadd.f32 %v1227, %v1497
  %1499 = vmatprep.mubr.f32.mxu0 0.0
  %1500 = vmatmul.mubr.f32.gmra.mxu0 %v1137
  %v1501 = vpop.f32.mrf.mxu0
  %v1502 = vadd.f32 %v1223, %v1501
  %v1503 = vpop.f32.mrf.mxu0
  %v1504 = vadd.f32 %v1227, %v1503
  %1505 = vmatprep.mubr.f32.mxu0 0.0
  %1506 = vmatmul.mubr.f32.gmra.mxu0 %v1138
  %v1507 = vpop.f32.mrf.mxu0
  %v1508 = vadd.f32 %v1223, %v1507
  %v1509 = vpop.f32.mrf.mxu0
  %v1510 = vadd.f32 %v1227, %v1509
  %1511 = vmatprep.mubr.f32.mxu0 0.0
  %1512 = vmatmul.mubr.f32.gmra.mxu0 %v1139
  %v1513 = vpop.f32.mrf.mxu0
  %v1514 = vadd.f32 %v1223, %v1513
  %v1515 = vpop.f32.mrf.mxu0
  %v1516 = vadd.f32 %v1227, %v1515
  %1517 = vmatprep.mubr.f32.mxu0 0.0
  %1518 = vmatmul.mubr.f32.gmra.mxu0 %v1140
  %v1519 = vpop.f32.mrf.mxu0
  %v1520 = vadd.f32 %v1223, %v1519
  %v1521 = vpop.f32.mrf.mxu0
  %v1522 = vadd.f32 %v1227, %v1521
  %1523 = vmatprep.mubr.f32.mxu0 0.0
  %1524 = vmatmul.mubr.f32.gmra.mxu0 %v1141
  %v1525 = vpop.f32.mrf.mxu0
  %v1526 = vadd.f32 %v1223, %v1525
  %v1527 = vpop.f32.mrf.mxu0
  %v1528 = vadd.f32 %v1227, %v1527
  %1529 = vmatprep.mubr.f32.mxu0 0.0
  %1530 = vmatmul.mubr.f32.gmra.mxu0 %v1142
  %v1531 = vpop.f32.mrf.mxu0
  %v1532 = vadd.f32 %v1223, %v1531
  %v1533 = vpop.f32.mrf.mxu0
  %v1534 = vadd.f32 %v1227, %v1533
  %1535 = vmatprep.mubr.f32.mxu0 0.0
  %1536 = vmatmul.mubr.f32.gmra.mxu0 %v1143
  %v1537 = vpop.f32.mrf.mxu0
  %v1538 = vadd.f32 %v1223, %v1537
  %v1539 = vpop.f32.mrf.mxu0
  %v1540 = vadd.f32 %v1227, %v1539
  %1541 = vmatprep.mubr.f32.mxu0 0.0
  %1542 = vmatmul.mubr.f32.gmra.mxu0 %v1144
  %v1543 = vpop.f32.mrf.mxu0
  %v1544 = vadd.f32 %v1223, %v1543
  %v1545 = vpop.f32.mrf.mxu0
  %v1546 = vadd.f32 %v1227, %v1545
  %1547 = vmatprep.mubr.f32.mxu0 0.0
  %1548 = vmatmul.mubr.f32.gmra.mxu0 %v1145
  %v1549 = vpop.f32.mrf.mxu0
  %v1550 = vadd.f32 %v1223, %v1549
  %v1551 = vpop.f32.mrf.mxu0
  %v1552 = vadd.f32 %v1227, %v1551
  %1553 = vdwg.mxu0
  %1554 = vst [vmem:[%s8] sm:$0xff] %v1299
  %1555 = vst [vmem:[%s8 + $0x8] sm:$0xff] %v1301
  %1556 = vst [vmem:[%s8 + $0x10] sm:$0xff] %v1460
  %1557 = vst [vmem:[%s8 + $0x18] sm:$0xff] %v1462
  %1558 = vst [vmem:[%s8 + $0x20] sm:$0xff] %v1305
  %1559 = vst [vmem:[%s8 + $0x28] sm:$0xff] %v1307
  %1560 = vst [vmem:[%s8 + $0x30] sm:$0xff] %v1466
  %1561 = vst [vmem:[%s8 + $0x38] sm:$0xff] %v1468
  %1562 = vst [vmem:[%s8 + $0x40] sm:$0xff] %v1311
  %1563 = vst [vmem:[%s8 + $0x48] sm:$0xff] %v1313
  %1564 = vst [vmem:[%s8 + $0x50] sm:$0xff] %v1472
  %1565 = vst [vmem:[%s8 + $0x58] sm:$0xff] %v1474
  %1566 = vst [vmem:[%s8 + $0x60] sm:$0xff] %v1317
  %1567 = vst [vmem:[%s8 + $0x68] sm:$0xff] %v1319
  %1568 = vst [vmem:[%s8 + $0x70] sm:$0xff] %v1478
  %1569 = vst [vmem:[%s8 + $0x78] sm:$0xff] %v1480
  %1570 = vst [vmem:[%s8 + $0x80] sm:$0xff] %v1323
  %1571 = vst [vmem:[%s8 + $0x88] sm:$0xff] %v1325
  %1572 = vst [vmem:[%s8 + $0x90] sm:$0xff] %v1484
  %1573 = vst [vmem:[%s8 + $0x98] sm:$0xff] %v1486
  %1574 = vst [vmem:[%s8 + $0xa0] sm:$0xff] %v1329
  %1575 = vst [vmem:[%s8 + $0xa8] sm:$0xff] %v1331
  %1576 = vst [vmem:[%s8 + $0xb0] sm:$0xff] %v1490
  %1577 = vst [vmem:[%s8 + $0xb8] sm:$0xff] %v1492
  %1578 = vst [vmem:[%s8 + $0xc0] sm:$0xff] %v1335
  %1579 = vst [vmem:[%s8 + $0xc8] sm:$0xff] %v1337
  %1580 = vst [vmem:[%s8 + $0xd0] sm:$0xff] %v1496
  %1581 = vst [vmem:[%s8 + $0xd8] sm:$0xff] %v1498
  %1582 = vst [vmem:[%s8 + $0xe0] sm:$0xff] %v1341
  %1583 = vst [vmem:[%s8 + $0xe8] sm:$0xff] %v1343
  %1584 = vst [vmem:[%s8 + $0xf0] sm:$0xff] %v1502
  %1585 = vst [vmem:[%s8 + $0xf8] sm:$0xff] %v1504
  %1586 = vst [vmem:[%s8 + $0x100] sm:$0xff] %v1347
  %1587 = vst [vmem:[%s8 + $0x108] sm:$0xff] %v1349
  %1588 = vst [vmem:[%s8 + $0x110] sm:$0xff] %v1508
  %1589 = vst [vmem:[%s8 + $0x118] sm:$0xff] %v1510
  %1590 = vst [vmem:[%s8 + $0x120] sm:$0xff] %v1353
  %1591 = vst [vmem:[%s8 + $0x128] sm:$0xff] %v1355
  %1592 = vst [vmem:[%s8 + $0x130] sm:$0xff] %v1514
  %1593 = vst [vmem:[%s8 + $0x138] sm:$0xff] %v1516
  %1594 = vst [vmem:[%s8 + $0x140] sm:$0xff] %v1359
  %1595 = vst [vmem:[%s8 + $0x148] sm:$0xff] %v1361
  %1596 = vst [vmem:[%s8 + $0x150] sm:$0xff] %v1520
  %1597 = vst [vmem:[%s8 + $0x158] sm:$0xff] %v1522
  %1598 = vst [vmem:[%s8 + $0x160] sm:$0xff] %v1365
  %1599 = vst [vmem:[%s8 + $0x168] sm:$0xff] %v1367
  %1600 = vst [vmem:[%s8 + $0x170] sm:$0xff] %v1526
  %1601 = vst [vmem:[%s8 + $0x178] sm:$0xff] %v1528
  %1602 = vst [vmem:[%s8 + $0x180] sm:$0xff] %v1371
  %1603 = vst [vmem:[%s8 + $0x188] sm:$0xff] %v1373
  %1604 = vst [vmem:[%s8 + $0x190] sm:$0xff] %v1532
  %1605 = vst [vmem:[%s8 + $0x198] sm:$0xff] %v1534
  %1606 = vst [vmem:[%s8 + $0x1a0] sm:$0xff] %v1377
  %1607 = vst [vmem:[%s8 + $0x1a8] sm:$0xff] %v1379
  %1608 = vst [vmem:[%s8 + $0x1b0] sm:$0xff] %v1538
  %1609 = vst [vmem:[%s8 + $0x1b8] sm:$0xff] %v1540
  %1610 = vst [vmem:[%s8 + $0x1c0] sm:$0xff] %v1383
  %1611 = vst [vmem:[%s8 + $0x1c8] sm:$0xff] %v1385
  %1612 = vst [vmem:[%s8 + $0x1d0] sm:$0xff] %v1544
  %1613 = vst [vmem:[%s8 + $0x1d8] sm:$0xff] %v1546
  %1614 = vst [vmem:[%s8 + $0x1e0] sm:$0xff] %v1389
  %1615 = vst [vmem:[%s8 + $0x1e8] sm:$0xff] %v1391
  %1616 = vst [vmem:[%s8 + $0x1f0] sm:$0xff] %v1550
  %1617 = vst [vmem:[%s8 + $0x1f8] sm:$0xff] %v1552
  // Predicated region
  $region34: #{vitup2_forward.1} parent=0 // pred_check
    _
  $region35: #{vitup2_forward.1} parent=0 // pred_check_branch
    %1619 = sbr.rel (0) target = $region37
  $region36: #{vitup2_forward.1} parent=0 // pred_region
    _
  $region37: #{vitup2_forward.1} parent=0 // pred_fallthru
    _
  // Predicated region
  $region38: #{vitup2_forward.1} parent=0 // pred_check
    _
  $region39: #{vitup2_forward.1} parent=0 // pred_check_branch
    %1621 = sbr.rel (0) target = $region41
  $region40: #{vitup2_forward.1} parent=0 // pred_region
    _
  $region41: #{vitup2_forward.1} parent=0 // pred_fallthru
    _

</llo_original>
